<compile_context>
chip_gen: v7x
topology: tpu7x:2x2x1
jax: 0.10.0
libtpu: 0.0.40
codegen_flags: <defaults>
</compile_context>

<pallas_src>
import functools

import jax
import jax.numpy as jnp
from jax.experimental import pallas as pl
from jax.experimental.pallas import tpu as pltpu  # noqa: F401  (TPU backend)

IN_DIM = 4
HIDDEN = 10
OUT_DIM = 8


def simple_nn_kernel(xcat_ref, win_ref, wh_ref, bias_ref, out_ref, *, B, T):
    f32 = jnp.float32
    H = HIDDEN
    H2 = 2 * H
    H3 = 3 * H

    # ---- unpack the single packed bias vector (one-time static lane slices) --
    bias = bias_ref[...]                              # (1, 64)
    b1 = bias[:, 0:H]                                 # fc1 bias              (1,10)
    gi_bias = bias[:, H:H + H3]                       # b_ih + [b_hr,b_hz,0]  (1,30)
    bhh_n = bias[:, 4 * H:5 * H]                      # b_hn                  (1,10)
    b2 = bias[:, 5 * H:5 * H + OUT_DIM]               # fc2 bias              (1,8)

    # ---- one fused input projection (fc1 + GRU input proj, all timesteps) ----
    # (B + T*B, 4) x (4, 40) on the MXU, completely off the serial h-chain.
    y = jnp.dot(xcat_ref[...], win_ref[...], preferred_element_type=f32)

    a = jnp.maximum(y[0:B, 0:H] + b1, 0.0)            # fc1 + relu            (B,10)
    gi_all = y[B:B + T * B, H:H + H3] + gi_bias       # packed gate pre-acts  (T*B,30)

    # ---- h-side weights (one load), gates packed [r | z | n] along lanes -----
    wh = wh_ref[...]                                  # (10, 46)
    whh = wh[:, 0:H3]                                 # W_hh packed           (10,30)
    w2h = wh[:, H3:H3 + OUT_DIM]                      # fc2 (h half)          (10,8)
    w2a = wh[:, H3 + OUT_DIM:H3 + 2 * OUT_DIM]        # fc2 (a half)          (10,8)

    # fc2 'a' branch early: depends only on `a`, hides under the recurrence.
    logits_a = jnp.dot(a, w2a, preferred_element_type=f32) + b2   # (B,8)

    # Hoist loop-invariant sublane broadcasts of the recurrent weight rows.
    whh_rows = [jnp.broadcast_to(whh[k:k + 1, :], (B, H3)) for k in range(H)]

    # ---- GRU recurrence (h0 = 0, PyTorch gate order [r, z, n]) ---------------
    h = jnp.zeros((B, H), f32)
    for t in range(T):                                # T static -> unrolled
        gi_t = gi_all[t * B:(t + 1) * B, :]           # (B,30), independent of h

        # gh = h @ W_hh^T as a packed-lane VPU contraction (K=10); two
        # independent partial accumulators halve the dependent add depth.
        acc0 = h[:, 0:1] * whh_rows[0]
        acc1 = h[:, 1:2] * whh_rows[1]
        for k in range(2, H, 2):
            acc0 = acc0 + h[:, k:k + 1] * whh_rows[k]
            acc1 = acc1 + h[:, k + 1:k + 2] * whh_rows[k + 1]
        gh = acc0 + acc1                              # (B,30)

        pre = gi_t + gh                               # r/z lanes already hold b_hh
        rz = jax.nn.sigmoid(pre[:, 0:H2])             # (B,20) single EUP pass
        r = rz[:, 0:H]
        z = rz[:, H:H2]
        n = jnp.tanh(gi_t[:, H2:H3] + r * (gh[:, H2:H3] + bhh_n))
        h = (1.0 - z) * n + z * h                     # (B,10)

    # ---- fc2 'h' branch: K=10 VPU contraction, no MXU round-trip on the tail -
    lacc0 = h[:, 0:1] * w2h[0:1, :]
    lacc1 = h[:, 1:2] * w2h[1:2, :]
    for k in range(2, H, 2):
        lacc0 = lacc0 + h[:, k:k + 1] * w2h[k:k + 1, :]
        lacc1 = lacc1 + h[:, k + 1:k + 2] * w2h[k + 1:k + 2, :]
    logits = logits_a + lacc0 + lacc1                 # (B,8)

    # ---- softmax (EUP exp + approx reciprocal on the EUP slot) ---------------
    m = jnp.max(logits, axis=-1, keepdims=True)
    e = jnp.exp(logits - m)
    denom = jnp.sum(e, axis=-1, keepdims=True)
    out_ref[...] = (e * pl.reciprocal(denom, approx=True)).astype(out_ref.dtype)


def simple_nn_forward(animal_input, visible_animals_input, params):
    B, T, _ = visible_animals_input.shape
    H = HIDDEN
    f32 = jnp.float32

    # Fused input slab: row 0..B-1 = animal_input; rows B.. = time-major sequence
    # (row B + t*B + b holds timestep t, batch b).
    vis_flat = jnp.transpose(visible_animals_input, (1, 0, 2)).reshape(T * B, IN_DIM)
    xcat = jnp.concatenate([animal_input.astype(f32), vis_flat.astype(f32)], axis=0)

    # Fused input-side weight: [fc1_w.T | W_ih.T] -> (4, 40); GRU gate columns
    # land in PyTorch order [r, z, n].
    w1 = params["fc1_w"].T.astype(f32)                        # (4, 10)
    wih_all = params["gru_w_ih"].T.astype(f32)                # (4, 30)
    win = jnp.concatenate([w1, wih_all], axis=1)              # (4, 40)

    # Fused h-side weight: [W_hh.T | fc2_h | fc2_a] -> (10, 46).
    whh_all = params["gru_w_hh"].T.astype(f32)                # (10, 30)
    w2 = params["fc2_w"].T.astype(f32)                        # (20, 8)
    w2a, w2h = w2[:H], w2[H:]                                 # (10, 8) each
    wh = jnp.concatenate([whh_all, w2h, w2a], axis=1)         # (10, 46)

    # One packed bias vector: [b1 | (b_ih + [b_hr, b_hz, 0]) | b_hn | b2 | pad].
    bih = params["gru_b_ih"].astype(f32)
    bhh = params["gru_b_hh"].astype(f32)
    gi_bias = bih + jnp.concatenate([bhh[:2 * H], jnp.zeros((H,), f32)])
    bias_pack = jnp.zeros((1, 64), f32)
    bias_pack = bias_pack.at[0, 0:H].set(params["fc1_b"].astype(f32))
    bias_pack = bias_pack.at[0, H:4 * H].set(gi_bias)
    bias_pack = bias_pack.at[0, 4 * H:5 * H].set(bhh[2 * H:3 * H])
    bias_pack = bias_pack.at[0, 5 * H:5 * H + OUT_DIM].set(params["fc2_b"].astype(f32))

    # Tiny model: no grid, single whole-array VMEM blocks (default BlockSpecs);
    # total resident footprint is a few KiB, far under VMEM on v5e/v6e/v7x.
    return pl.pallas_call(
        functools.partial(simple_nn_kernel, B=B, T=T),
        out_shape=jax.ShapeDtypeStruct((B, OUT_DIM), jnp.float32),
    )(xcat, win, wh, bias_pack)


# ---------------- pure-JAX reference for correctness check -----------------
def reference_forward(animal_input, visible_animals_input, params):
    a = jnp.maximum(animal_input @ params["fc1_w"].T + params["fc1_b"], 0.0)
    B, T, _ = visible_animals_input.shape
    H = HIDDEN
    h = jnp.zeros((B, H), jnp.float32)
    for t in range(T):
        x_t = visible_animals_input[:, t, :]
        gi = x_t @ params["gru_w_ih"].T + params["gru_b_ih"]
        gh = h @ params["gru_w_hh"].T + params["gru_b_hh"]
        r = jax.nn.sigmoid(gi[:, 0:H] + gh[:, 0:H])
        z = jax.nn.sigmoid(gi[:, H:2 * H] + gh[:, H:2 * H])
        n = jnp.tanh(gi[:, 2 * H:3 * H] + r * gh[:, 2 * H:3 * H])
        h = (1.0 - z) * n + z * h
    combined = jnp.concatenate([a, h], axis=-1)
    logits = combined @ params["fc2_w"].T + params["fc2_b"]
    return jax.nn.softmax(logits, axis=-1)


def init_params(key):
    """Deterministic init matching PyTorch parameter shapes."""
    ks = jax.random.split(key, 8)

    def u(k, shape, fan_in):
        bound = 1.0 / jnp.sqrt(float(fan_in))
        return jax.random.uniform(k, shape, jnp.float32, -bound, bound)

    return {
        "fc1_w": u(ks[0], (10, 4), 4),            # nn.Linear(4, 10).weight
        "fc1_b": u(ks[1], (10,), 4),              # nn.Linear(4, 10).bias
        "gru_w_ih": u(ks[2], (30, 4), 10),        # GRU.weight_ih_l0 (3*H, in)
        "gru_w_hh": u(ks[3], (30, 10), 10),       # GRU.weight_hh_l0 (3*H, H)
        "gru_b_ih": u(ks[4], (30,), 10),          # GRU.bias_ih_l0
        "gru_b_hh": u(ks[5], (30,), 10),          # GRU.bias_hh_l0
        "fc2_w": u(ks[6], (8, 20), 20),           # nn.Linear(20, 8).weight
        "fc2_b": u(ks[7], (8,), 20),              # nn.Linear(20, 8).bias
    }


if __name__ == "__main__":
    key = jax.random.PRNGKey(0)
    k_par, k_animal, k_vis = jax.random.split(key, 3)

    B, T = 2, 8
    params = init_params(k_par)
    animal_input = jax.random.normal(k_animal, (B, IN_DIM), jnp.float32)
    visible_animals_input = jax.random.normal(k_vis, (B, T, IN_DIM), jnp.float32)

    out = simple_nn_forward(animal_input, visible_animals_input, params)
    out = jax.block_until_ready(out)

    ref = reference_forward(animal_input, visible_animals_input, params)
    assert out.shape == (B, OUT_DIM)
    assert jnp.all(jnp.isfinite(out))
    # Remaining deviation sources: MXU default-precision passes on the (tiny)
    # input-projection / fc2a dots and the approx softmax reciprocal.
    assert jnp.allclose(out, ref, atol=1e-2, rtol=1e-2), (out, ref)

    print("KERNEL_OK")
</pallas_src>

<mosaic_0001>
module attributes {stable_mosaic.version = 11 : i64} {
  func.func @simple_nn_kernel(%arg0: memref<18x4xf32, #tpu.memory_space<vmem>>, %arg1: memref<4x40xf32, #tpu.memory_space<vmem>>, %arg2: memref<10x46xf32, #tpu.memory_space<vmem>>, %arg3: memref<1x64xf32, #tpu.memory_space<vmem>>, %arg4: memref<2x8xf32, #tpu.memory_space<vmem>>) attributes {dimension_semantics = [], scalar_prefetch = 0 : i64, scratch_operands = 0 : i64, tpu.core_type = #tpu.core_type<tc>} {
    %c0 = arith.constant 0 : index
    %c0_0 = arith.constant 0 : index
    %0 = vector.load %arg3[%c0, %c0_0] : memref<1x64xf32, #tpu.memory_space<vmem>>, vector<1x64xf32>
    %1 = vector.extract_strided_slice %0 {offsets = [0, 0], sizes = [1, 10], strides = [1, 1]} : vector<1x64xf32> to vector<1x10xf32>
    %2 = vector.extract_strided_slice %0 {offsets = [0, 10], sizes = [1, 30], strides = [1, 1]} : vector<1x64xf32> to vector<1x30xf32>
    %3 = vector.extract_strided_slice %0 {offsets = [0, 40], sizes = [1, 10], strides = [1, 1]} : vector<1x64xf32> to vector<1x10xf32>
    %4 = vector.extract_strided_slice %0 {offsets = [0, 50], sizes = [1, 8], strides = [1, 1]} : vector<1x64xf32> to vector<1x8xf32>
    %c0_1 = arith.constant 0 : index
    %c0_2 = arith.constant 0 : index
    %5 = vector.load %arg0[%c0_1, %c0_2] : memref<18x4xf32, #tpu.memory_space<vmem>>, vector<18x4xf32>
    %c0_3 = arith.constant 0 : index
    %c0_4 = arith.constant 0 : index
    %6 = vector.load %arg1[%c0_3, %c0_4] : memref<4x40xf32, #tpu.memory_space<vmem>>, vector<4x40xf32>
    %cst = arith.constant dense<0.000000e+00> : vector<18x40xf32>
    %7 = tpu.matmul %5, %6, %cst {dimension_numbers = #tpu.dot_dimension_numbers<[1], [0], [0], [1], [0, 0, 1, 1], [], []>} : vector<18x4xf32>, vector<4x40xf32>, vector<18x40xf32> -> vector<18x40xf32>
    %8 = vector.extract_strided_slice %7 {offsets = [0, 0], sizes = [2, 10], strides = [1, 1]} : vector<18x40xf32> to vector<2x10xf32>
    %9 = vector.broadcast %1 : vector<1x10xf32> to vector<2x10xf32>
    %10 = arith.addf %8, %9 : vector<2x10xf32>
    %cst_5 = arith.constant 0.000000e+00 : f32
    %11 = vector.broadcast %cst_5 : f32 to vector<2x10xf32>
    %12 = arith.maximumf %10, %11 : vector<2x10xf32>
    %13 = vector.extract_strided_slice %7 {offsets = [2, 10], sizes = [16, 30], strides = [1, 1]} : vector<18x40xf32> to vector<16x30xf32>
    %14 = vector.broadcast %2 : vector<1x30xf32> to vector<16x30xf32>
    %15 = arith.addf %13, %14 : vector<16x30xf32>
    %c0_6 = arith.constant 0 : index
    %c0_7 = arith.constant 0 : index
    %16 = vector.load %arg2[%c0_6, %c0_7] : memref<10x46xf32, #tpu.memory_space<vmem>>, vector<10x46xf32>
    %17 = vector.extract_strided_slice %16 {offsets = [0, 0], sizes = [10, 30], strides = [1, 1]} : vector<10x46xf32> to vector<10x30xf32>
    %18 = vector.extract_strided_slice %16 {offsets = [0, 30], sizes = [10, 8], strides = [1, 1]} : vector<10x46xf32> to vector<10x8xf32>
    %19 = vector.extract_strided_slice %16 {offsets = [0, 38], sizes = [10, 8], strides = [1, 1]} : vector<10x46xf32> to vector<10x8xf32>
    %cst_8 = arith.constant dense<0.000000e+00> : vector<2x8xf32>
    %20 = tpu.matmul %12, %19, %cst_8 {dimension_numbers = #tpu.dot_dimension_numbers<[1], [0], [0], [1], [0, 0, 1, 1], [], []>} : vector<2x10xf32>, vector<10x8xf32>, vector<2x8xf32> -> vector<2x8xf32>
    %21 = vector.broadcast %4 : vector<1x8xf32> to vector<2x8xf32>
    %22 = arith.addf %20, %21 : vector<2x8xf32>
    %23 = vector.extract_strided_slice %17 {offsets = [0, 0], sizes = [1, 30], strides = [1, 1]} : vector<10x30xf32> to vector<1x30xf32>
    %24 = vector.shape_cast %23 : vector<1x30xf32> to vector<1x30xf32>
    %25 = vector.broadcast %24 : vector<1x30xf32> to vector<2x30xf32>
    %26 = vector.extract_strided_slice %17 {offsets = [1, 0], sizes = [1, 30], strides = [1, 1]} : vector<10x30xf32> to vector<1x30xf32>
    %27 = vector.shape_cast %26 : vector<1x30xf32> to vector<1x30xf32>
    %28 = vector.broadcast %27 : vector<1x30xf32> to vector<2x30xf32>
    %29 = vector.extract_strided_slice %17 {offsets = [2, 0], sizes = [1, 30], strides = [1, 1]} : vector<10x30xf32> to vector<1x30xf32>
    %30 = vector.shape_cast %29 : vector<1x30xf32> to vector<1x30xf32>
    %31 = vector.broadcast %30 : vector<1x30xf32> to vector<2x30xf32>
    %32 = vector.extract_strided_slice %17 {offsets = [3, 0], sizes = [1, 30], strides = [1, 1]} : vector<10x30xf32> to vector<1x30xf32>
    %33 = vector.shape_cast %32 : vector<1x30xf32> to vector<1x30xf32>
    %34 = vector.broadcast %33 : vector<1x30xf32> to vector<2x30xf32>
    %35 = vector.extract_strided_slice %17 {offsets = [4, 0], sizes = [1, 30], strides = [1, 1]} : vector<10x30xf32> to vector<1x30xf32>
    %36 = vector.shape_cast %35 : vector<1x30xf32> to vector<1x30xf32>
    %37 = vector.broadcast %36 : vector<1x30xf32> to vector<2x30xf32>
    %38 = vector.extract_strided_slice %17 {offsets = [5, 0], sizes = [1, 30], strides = [1, 1]} : vector<10x30xf32> to vector<1x30xf32>
    %39 = vector.shape_cast %38 : vector<1x30xf32> to vector<1x30xf32>
    %40 = vector.broadcast %39 : vector<1x30xf32> to vector<2x30xf32>
    %41 = vector.extract_strided_slice %17 {offsets = [6, 0], sizes = [1, 30], strides = [1, 1]} : vector<10x30xf32> to vector<1x30xf32>
    %42 = vector.shape_cast %41 : vector<1x30xf32> to vector<1x30xf32>
    %43 = vector.broadcast %42 : vector<1x30xf32> to vector<2x30xf32>
    %44 = vector.extract_strided_slice %17 {offsets = [7, 0], sizes = [1, 30], strides = [1, 1]} : vector<10x30xf32> to vector<1x30xf32>
    %45 = vector.shape_cast %44 : vector<1x30xf32> to vector<1x30xf32>
    %46 = vector.broadcast %45 : vector<1x30xf32> to vector<2x30xf32>
    %47 = vector.extract_strided_slice %17 {offsets = [8, 0], sizes = [1, 30], strides = [1, 1]} : vector<10x30xf32> to vector<1x30xf32>
    %48 = vector.shape_cast %47 : vector<1x30xf32> to vector<1x30xf32>
    %49 = vector.broadcast %48 : vector<1x30xf32> to vector<2x30xf32>
    %50 = vector.extract_strided_slice %17 {offsets = [9, 0], sizes = [1, 30], strides = [1, 1]} : vector<10x30xf32> to vector<1x30xf32>
    %51 = vector.shape_cast %50 : vector<1x30xf32> to vector<1x30xf32>
    %52 = vector.broadcast %51 : vector<1x30xf32> to vector<2x30xf32>
    %cst_9 = arith.constant 0.000000e+00 : f32
    %53 = vector.broadcast %cst_9 : f32 to vector<2x10xf32>
    %54 = vector.extract_strided_slice %15 {offsets = [0, 0], sizes = [2, 30], strides = [1, 1]} : vector<16x30xf32> to vector<2x30xf32>
    %55 = vector.extract_strided_slice %53 {offsets = [0, 0], sizes = [2, 1], strides = [1, 1]} : vector<2x10xf32> to vector<2x1xf32>
    %56 = vector.broadcast %55 : vector<2x1xf32> to vector<2x30xf32>
    %57 = arith.mulf %56, %25 : vector<2x30xf32>
    %58 = vector.extract_strided_slice %53 {offsets = [0, 1], sizes = [2, 1], strides = [1, 1]} : vector<2x10xf32> to vector<2x1xf32>
    %59 = vector.broadcast %58 : vector<2x1xf32> to vector<2x30xf32>
    %60 = arith.mulf %59, %28 : vector<2x30xf32>
    %61 = vector.extract_strided_slice %53 {offsets = [0, 2], sizes = [2, 1], strides = [1, 1]} : vector<2x10xf32> to vector<2x1xf32>
    %62 = vector.broadcast %61 : vector<2x1xf32> to vector<2x30xf32>
    %63 = arith.mulf %62, %31 : vector<2x30xf32>
    %64 = arith.addf %57, %63 : vector<2x30xf32>
    %65 = vector.extract_strided_slice %53 {offsets = [0, 3], sizes = [2, 1], strides = [1, 1]} : vector<2x10xf32> to vector<2x1xf32>
    %66 = vector.broadcast %65 : vector<2x1xf32> to vector<2x30xf32>
    %67 = arith.mulf %66, %34 : vector<2x30xf32>
    %68 = arith.addf %60, %67 : vector<2x30xf32>
    %69 = vector.extract_strided_slice %53 {offsets = [0, 4], sizes = [2, 1], strides = [1, 1]} : vector<2x10xf32> to vector<2x1xf32>
    %70 = vector.broadcast %69 : vector<2x1xf32> to vector<2x30xf32>
    %71 = arith.mulf %70, %37 : vector<2x30xf32>
    %72 = arith.addf %64, %71 : vector<2x30xf32>
    %73 = vector.extract_strided_slice %53 {offsets = [0, 5], sizes = [2, 1], strides = [1, 1]} : vector<2x10xf32> to vector<2x1xf32>
    %74 = vector.broadcast %73 : vector<2x1xf32> to vector<2x30xf32>
    %75 = arith.mulf %74, %40 : vector<2x30xf32>
    %76 = arith.addf %68, %75 : vector<2x30xf32>
    %77 = vector.extract_strided_slice %53 {offsets = [0, 6], sizes = [2, 1], strides = [1, 1]} : vector<2x10xf32> to vector<2x1xf32>
    %78 = vector.broadcast %77 : vector<2x1xf32> to vector<2x30xf32>
    %79 = arith.mulf %78, %43 : vector<2x30xf32>
    %80 = arith.addf %72, %79 : vector<2x30xf32>
    %81 = vector.extract_strided_slice %53 {offsets = [0, 7], sizes = [2, 1], strides = [1, 1]} : vector<2x10xf32> to vector<2x1xf32>
    %82 = vector.broadcast %81 : vector<2x1xf32> to vector<2x30xf32>
    %83 = arith.mulf %82, %46 : vector<2x30xf32>
    %84 = arith.addf %76, %83 : vector<2x30xf32>
    %85 = vector.extract_strided_slice %53 {offsets = [0, 8], sizes = [2, 1], strides = [1, 1]} : vector<2x10xf32> to vector<2x1xf32>
    %86 = vector.broadcast %85 : vector<2x1xf32> to vector<2x30xf32>
    %87 = arith.mulf %86, %49 : vector<2x30xf32>
    %88 = arith.addf %80, %87 : vector<2x30xf32>
    %89 = vector.extract_strided_slice %53 {offsets = [0, 9], sizes = [2, 1], strides = [1, 1]} : vector<2x10xf32> to vector<2x1xf32>
    %90 = vector.broadcast %89 : vector<2x1xf32> to vector<2x30xf32>
    %91 = arith.mulf %90, %52 : vector<2x30xf32>
    %92 = arith.addf %84, %91 : vector<2x30xf32>
    %93 = arith.addf %88, %92 : vector<2x30xf32>
    %94 = arith.addf %54, %93 : vector<2x30xf32>
    %95 = vector.extract_strided_slice %94 {offsets = [0, 0], sizes = [2, 20], strides = [1, 1]} : vector<2x30xf32> to vector<2x20xf32>
    %96 = arith.negf %95 : vector<2x20xf32>
    %97 = math.exp %96 : vector<2x20xf32>
    %cst_10 = arith.constant 1.000000e+00 : f32
    %98 = vector.broadcast %cst_10 : f32 to vector<2x20xf32>
    %99 = arith.addf %98, %97 : vector<2x20xf32>
    %100 = arith.divf %98, %99 : vector<2x20xf32>
    %101 = vector.extract_strided_slice %100 {offsets = [0, 0], sizes = [2, 10], strides = [1, 1]} : vector<2x20xf32> to vector<2x10xf32>
    %102 = vector.extract_strided_slice %100 {offsets = [0, 10], sizes = [2, 10], strides = [1, 1]} : vector<2x20xf32> to vector<2x10xf32>
    %103 = vector.extract_strided_slice %54 {offsets = [0, 20], sizes = [2, 10], strides = [1, 1]} : vector<2x30xf32> to vector<2x10xf32>
    %104 = vector.extract_strided_slice %93 {offsets = [0, 20], sizes = [2, 10], strides = [1, 1]} : vector<2x30xf32> to vector<2x10xf32>
    %105 = vector.broadcast %3 : vector<1x10xf32> to vector<2x10xf32>
    %106 = arith.addf %104, %105 : vector<2x10xf32>
    %107 = arith.mulf %101, %106 : vector<2x10xf32>
    %108 = arith.addf %103, %107 : vector<2x10xf32>
    %109 = math.tanh %108 : vector<2x10xf32>
    %cst_11 = arith.constant 1.000000e+00 : f32
    %110 = vector.broadcast %cst_11 : f32 to vector<2x10xf32>
    %111 = arith.subf %110, %102 : vector<2x10xf32>
    %112 = arith.mulf %111, %109 : vector<2x10xf32>
    %113 = arith.mulf %102, %53 : vector<2x10xf32>
    %114 = arith.addf %112, %113 : vector<2x10xf32>
    %115 = vector.extract_strided_slice %15 {offsets = [2, 0], sizes = [2, 30], strides = [1, 1]} : vector<16x30xf32> to vector<2x30xf32>
    %116 = vector.extract_strided_slice %114 {offsets = [0, 0], sizes = [2, 1], strides = [1, 1]} : vector<2x10xf32> to vector<2x1xf32>
    %117 = vector.broadcast %116 : vector<2x1xf32> to vector<2x30xf32>
    %118 = arith.mulf %117, %25 : vector<2x30xf32>
    %119 = vector.extract_strided_slice %114 {offsets = [0, 1], sizes = [2, 1], strides = [1, 1]} : vector<2x10xf32> to vector<2x1xf32>
    %120 = vector.broadcast %119 : vector<2x1xf32> to vector<2x30xf32>
    %121 = arith.mulf %120, %28 : vector<2x30xf32>
    %122 = vector.extract_strided_slice %114 {offsets = [0, 2], sizes = [2, 1], strides = [1, 1]} : vector<2x10xf32> to vector<2x1xf32>
    %123 = vector.broadcast %122 : vector<2x1xf32> to vector<2x30xf32>
    %124 = arith.mulf %123, %31 : vector<2x30xf32>
    %125 = arith.addf %118, %124 : vector<2x30xf32>
    %126 = vector.extract_strided_slice %114 {offsets = [0, 3], sizes = [2, 1], strides = [1, 1]} : vector<2x10xf32> to vector<2x1xf32>
    %127 = vector.broadcast %126 : vector<2x1xf32> to vector<2x30xf32>
    %128 = arith.mulf %127, %34 : vector<2x30xf32>
    %129 = arith.addf %121, %128 : vector<2x30xf32>
    %130 = vector.extract_strided_slice %114 {offsets = [0, 4], sizes = [2, 1], strides = [1, 1]} : vector<2x10xf32> to vector<2x1xf32>
    %131 = vector.broadcast %130 : vector<2x1xf32> to vector<2x30xf32>
    %132 = arith.mulf %131, %37 : vector<2x30xf32>
    %133 = arith.addf %125, %132 : vector<2x30xf32>
    %134 = vector.extract_strided_slice %114 {offsets = [0, 5], sizes = [2, 1], strides = [1, 1]} : vector<2x10xf32> to vector<2x1xf32>
    %135 = vector.broadcast %134 : vector<2x1xf32> to vector<2x30xf32>
    %136 = arith.mulf %135, %40 : vector<2x30xf32>
    %137 = arith.addf %129, %136 : vector<2x30xf32>
    %138 = vector.extract_strided_slice %114 {offsets = [0, 6], sizes = [2, 1], strides = [1, 1]} : vector<2x10xf32> to vector<2x1xf32>
    %139 = vector.broadcast %138 : vector<2x1xf32> to vector<2x30xf32>
    %140 = arith.mulf %139, %43 : vector<2x30xf32>
    %141 = arith.addf %133, %140 : vector<2x30xf32>
    %142 = vector.extract_strided_slice %114 {offsets = [0, 7], sizes = [2, 1], strides = [1, 1]} : vector<2x10xf32> to vector<2x1xf32>
    %143 = vector.broadcast %142 : vector<2x1xf32> to vector<2x30xf32>
    %144 = arith.mulf %143, %46 : vector<2x30xf32>
    %145 = arith.addf %137, %144 : vector<2x30xf32>
    %146 = vector.extract_strided_slice %114 {offsets = [0, 8], sizes = [2, 1], strides = [1, 1]} : vector<2x10xf32> to vector<2x1xf32>
    %147 = vector.broadcast %146 : vector<2x1xf32> to vector<2x30xf32>
    %148 = arith.mulf %147, %49 : vector<2x30xf32>
    %149 = arith.addf %141, %148 : vector<2x30xf32>
    %150 = vector.extract_strided_slice %114 {offsets = [0, 9], sizes = [2, 1], strides = [1, 1]} : vector<2x10xf32> to vector<2x1xf32>
    %151 = vector.broadcast %150 : vector<2x1xf32> to vector<2x30xf32>
    %152 = arith.mulf %151, %52 : vector<2x30xf32>
    %153 = arith.addf %145, %152 : vector<2x30xf32>
    %154 = arith.addf %149, %153 : vector<2x30xf32>
    %155 = arith.addf %115, %154 : vector<2x30xf32>
    %156 = vector.extract_strided_slice %155 {offsets = [0, 0], sizes = [2, 20], strides = [1, 1]} : vector<2x30xf32> to vector<2x20xf32>
    %157 = arith.negf %156 : vector<2x20xf32>
    %158 = math.exp %157 : vector<2x20xf32>
    %cst_12 = arith.constant 1.000000e+00 : f32
    %159 = vector.broadcast %cst_12 : f32 to vector<2x20xf32>
    %160 = arith.addf %159, %158 : vector<2x20xf32>
    %161 = arith.divf %159, %160 : vector<2x20xf32>
    %162 = vector.extract_strided_slice %161 {offsets = [0, 0], sizes = [2, 10], strides = [1, 1]} : vector<2x20xf32> to vector<2x10xf32>
    %163 = vector.extract_strided_slice %161 {offsets = [0, 10], sizes = [2, 10], strides = [1, 1]} : vector<2x20xf32> to vector<2x10xf32>
    %164 = vector.extract_strided_slice %115 {offsets = [0, 20], sizes = [2, 10], strides = [1, 1]} : vector<2x30xf32> to vector<2x10xf32>
    %165 = vector.extract_strided_slice %154 {offsets = [0, 20], sizes = [2, 10], strides = [1, 1]} : vector<2x30xf32> to vector<2x10xf32>
    %166 = vector.broadcast %3 : vector<1x10xf32> to vector<2x10xf32>
    %167 = arith.addf %165, %166 : vector<2x10xf32>
    %168 = arith.mulf %162, %167 : vector<2x10xf32>
    %169 = arith.addf %164, %168 : vector<2x10xf32>
    %170 = math.tanh %169 : vector<2x10xf32>
    %cst_13 = arith.constant 1.000000e+00 : f32
    %171 = vector.broadcast %cst_13 : f32 to vector<2x10xf32>
    %172 = arith.subf %171, %163 : vector<2x10xf32>
    %173 = arith.mulf %172, %170 : vector<2x10xf32>
    %174 = arith.mulf %163, %114 : vector<2x10xf32>
    %175 = arith.addf %173, %174 : vector<2x10xf32>
    %176 = vector.extract_strided_slice %15 {offsets = [4, 0], sizes = [2, 30], strides = [1, 1]} : vector<16x30xf32> to vector<2x30xf32>
    %177 = vector.extract_strided_slice %175 {offsets = [0, 0], sizes = [2, 1], strides = [1, 1]} : vector<2x10xf32> to vector<2x1xf32>
    %178 = vector.broadcast %177 : vector<2x1xf32> to vector<2x30xf32>
    %179 = arith.mulf %178, %25 : vector<2x30xf32>
    %180 = vector.extract_strided_slice %175 {offsets = [0, 1], sizes = [2, 1], strides = [1, 1]} : vector<2x10xf32> to vector<2x1xf32>
    %181 = vector.broadcast %180 : vector<2x1xf32> to vector<2x30xf32>
    %182 = arith.mulf %181, %28 : vector<2x30xf32>
    %183 = vector.extract_strided_slice %175 {offsets = [0, 2], sizes = [2, 1], strides = [1, 1]} : vector<2x10xf32> to vector<2x1xf32>
    %184 = vector.broadcast %183 : vector<2x1xf32> to vector<2x30xf32>
    %185 = arith.mulf %184, %31 : vector<2x30xf32>
    %186 = arith.addf %179, %185 : vector<2x30xf32>
    %187 = vector.extract_strided_slice %175 {offsets = [0, 3], sizes = [2, 1], strides = [1, 1]} : vector<2x10xf32> to vector<2x1xf32>
    %188 = vector.broadcast %187 : vector<2x1xf32> to vector<2x30xf32>
    %189 = arith.mulf %188, %34 : vector<2x30xf32>
    %190 = arith.addf %182, %189 : vector<2x30xf32>
    %191 = vector.extract_strided_slice %175 {offsets = [0, 4], sizes = [2, 1], strides = [1, 1]} : vector<2x10xf32> to vector<2x1xf32>
    %192 = vector.broadcast %191 : vector<2x1xf32> to vector<2x30xf32>
    %193 = arith.mulf %192, %37 : vector<2x30xf32>
    %194 = arith.addf %186, %193 : vector<2x30xf32>
    %195 = vector.extract_strided_slice %175 {offsets = [0, 5], sizes = [2, 1], strides = [1, 1]} : vector<2x10xf32> to vector<2x1xf32>
    %196 = vector.broadcast %195 : vector<2x1xf32> to vector<2x30xf32>
    %197 = arith.mulf %196, %40 : vector<2x30xf32>
    %198 = arith.addf %190, %197 : vector<2x30xf32>
    %199 = vector.extract_strided_slice %175 {offsets = [0, 6], sizes = [2, 1], strides = [1, 1]} : vector<2x10xf32> to vector<2x1xf32>
    %200 = vector.broadcast %199 : vector<2x1xf32> to vector<2x30xf32>
    %201 = arith.mulf %200, %43 : vector<2x30xf32>
    %202 = arith.addf %194, %201 : vector<2x30xf32>
    %203 = vector.extract_strided_slice %175 {offsets = [0, 7], sizes = [2, 1], strides = [1, 1]} : vector<2x10xf32> to vector<2x1xf32>
    %204 = vector.broadcast %203 : vector<2x1xf32> to vector<2x30xf32>
    %205 = arith.mulf %204, %46 : vector<2x30xf32>
    %206 = arith.addf %198, %205 : vector<2x30xf32>
    %207 = vector.extract_strided_slice %175 {offsets = [0, 8], sizes = [2, 1], strides = [1, 1]} : vector<2x10xf32> to vector<2x1xf32>
    %208 = vector.broadcast %207 : vector<2x1xf32> to vector<2x30xf32>
    %209 = arith.mulf %208, %49 : vector<2x30xf32>
    %210 = arith.addf %202, %209 : vector<2x30xf32>
    %211 = vector.extract_strided_slice %175 {offsets = [0, 9], sizes = [2, 1], strides = [1, 1]} : vector<2x10xf32> to vector<2x1xf32>
    %212 = vector.broadcast %211 : vector<2x1xf32> to vector<2x30xf32>
    %213 = arith.mulf %212, %52 : vector<2x30xf32>
    %214 = arith.addf %206, %213 : vector<2x30xf32>
    %215 = arith.addf %210, %214 : vector<2x30xf32>
    %216 = arith.addf %176, %215 : vector<2x30xf32>
    %217 = vector.extract_strided_slice %216 {offsets = [0, 0], sizes = [2, 20], strides = [1, 1]} : vector<2x30xf32> to vector<2x20xf32>
    %218 = arith.negf %217 : vector<2x20xf32>
    %219 = math.exp %218 : vector<2x20xf32>
    %cst_14 = arith.constant 1.000000e+00 : f32
    %220 = vector.broadcast %cst_14 : f32 to vector<2x20xf32>
    %221 = arith.addf %220, %219 : vector<2x20xf32>
    %222 = arith.divf %220, %221 : vector<2x20xf32>
    %223 = vector.extract_strided_slice %222 {offsets = [0, 0], sizes = [2, 10], strides = [1, 1]} : vector<2x20xf32> to vector<2x10xf32>
    %224 = vector.extract_strided_slice %222 {offsets = [0, 10], sizes = [2, 10], strides = [1, 1]} : vector<2x20xf32> to vector<2x10xf32>
    %225 = vector.extract_strided_slice %176 {offsets = [0, 20], sizes = [2, 10], strides = [1, 1]} : vector<2x30xf32> to vector<2x10xf32>
    %226 = vector.extract_strided_slice %215 {offsets = [0, 20], sizes = [2, 10], strides = [1, 1]} : vector<2x30xf32> to vector<2x10xf32>
    %227 = vector.broadcast %3 : vector<1x10xf32> to vector<2x10xf32>
    %228 = arith.addf %226, %227 : vector<2x10xf32>
    %229 = arith.mulf %223, %228 : vector<2x10xf32>
    %230 = arith.addf %225, %229 : vector<2x10xf32>
    %231 = math.tanh %230 : vector<2x10xf32>
    %cst_15 = arith.constant 1.000000e+00 : f32
    %232 = vector.broadcast %cst_15 : f32 to vector<2x10xf32>
    %233 = arith.subf %232, %224 : vector<2x10xf32>
    %234 = arith.mulf %233, %231 : vector<2x10xf32>
    %235 = arith.mulf %224, %175 : vector<2x10xf32>
    %236 = arith.addf %234, %235 : vector<2x10xf32>
    %237 = vector.extract_strided_slice %15 {offsets = [6, 0], sizes = [2, 30], strides = [1, 1]} : vector<16x30xf32> to vector<2x30xf32>
    %238 = vector.extract_strided_slice %236 {offsets = [0, 0], sizes = [2, 1], strides = [1, 1]} : vector<2x10xf32> to vector<2x1xf32>
    %239 = vector.broadcast %238 : vector<2x1xf32> to vector<2x30xf32>
    %240 = arith.mulf %239, %25 : vector<2x30xf32>
    %241 = vector.extract_strided_slice %236 {offsets = [0, 1], sizes = [2, 1], strides = [1, 1]} : vector<2x10xf32> to vector<2x1xf32>
    %242 = vector.broadcast %241 : vector<2x1xf32> to vector<2x30xf32>
    %243 = arith.mulf %242, %28 : vector<2x30xf32>
    %244 = vector.extract_strided_slice %236 {offsets = [0, 2], sizes = [2, 1], strides = [1, 1]} : vector<2x10xf32> to vector<2x1xf32>
    %245 = vector.broadcast %244 : vector<2x1xf32> to vector<2x30xf32>
    %246 = arith.mulf %245, %31 : vector<2x30xf32>
    %247 = arith.addf %240, %246 : vector<2x30xf32>
    %248 = vector.extract_strided_slice %236 {offsets = [0, 3], sizes = [2, 1], strides = [1, 1]} : vector<2x10xf32> to vector<2x1xf32>
    %249 = vector.broadcast %248 : vector<2x1xf32> to vector<2x30xf32>
    %250 = arith.mulf %249, %34 : vector<2x30xf32>
    %251 = arith.addf %243, %250 : vector<2x30xf32>
    %252 = vector.extract_strided_slice %236 {offsets = [0, 4], sizes = [2, 1], strides = [1, 1]} : vector<2x10xf32> to vector<2x1xf32>
    %253 = vector.broadcast %252 : vector<2x1xf32> to vector<2x30xf32>
    %254 = arith.mulf %253, %37 : vector<2x30xf32>
    %255 = arith.addf %247, %254 : vector<2x30xf32>
    %256 = vector.extract_strided_slice %236 {offsets = [0, 5], sizes = [2, 1], strides = [1, 1]} : vector<2x10xf32> to vector<2x1xf32>
    %257 = vector.broadcast %256 : vector<2x1xf32> to vector<2x30xf32>
    %258 = arith.mulf %257, %40 : vector<2x30xf32>
    %259 = arith.addf %251, %258 : vector<2x30xf32>
    %260 = vector.extract_strided_slice %236 {offsets = [0, 6], sizes = [2, 1], strides = [1, 1]} : vector<2x10xf32> to vector<2x1xf32>
    %261 = vector.broadcast %260 : vector<2x1xf32> to vector<2x30xf32>
    %262 = arith.mulf %261, %43 : vector<2x30xf32>
    %263 = arith.addf %255, %262 : vector<2x30xf32>
    %264 = vector.extract_strided_slice %236 {offsets = [0, 7], sizes = [2, 1], strides = [1, 1]} : vector<2x10xf32> to vector<2x1xf32>
    %265 = vector.broadcast %264 : vector<2x1xf32> to vector<2x30xf32>
    %266 = arith.mulf %265, %46 : vector<2x30xf32>
    %267 = arith.addf %259, %266 : vector<2x30xf32>
    %268 = vector.extract_strided_slice %236 {offsets = [0, 8], sizes = [2, 1], strides = [1, 1]} : vector<2x10xf32> to vector<2x1xf32>
    %269 = vector.broadcast %268 : vector<2x1xf32> to vector<2x30xf32>
    %270 = arith.mulf %269, %49 : vector<2x30xf32>
    %271 = arith.addf %263, %270 : vector<2x30xf32>
    %272 = vector.extract_strided_slice %236 {offsets = [0, 9], sizes = [2, 1], strides = [1, 1]} : vector<2x10xf32> to vector<2x1xf32>
    %273 = vector.broadcast %272 : vector<2x1xf32> to vector<2x30xf32>
    %274 = arith.mulf %273, %52 : vector<2x30xf32>
    %275 = arith.addf %267, %274 : vector<2x30xf32>
    %276 = arith.addf %271, %275 : vector<2x30xf32>
    %277 = arith.addf %237, %276 : vector<2x30xf32>
    %278 = vector.extract_strided_slice %277 {offsets = [0, 0], sizes = [2, 20], strides = [1, 1]} : vector<2x30xf32> to vector<2x20xf32>
    %279 = arith.negf %278 : vector<2x20xf32>
    %280 = math.exp %279 : vector<2x20xf32>
    %cst_16 = arith.constant 1.000000e+00 : f32
    %281 = vector.broadcast %cst_16 : f32 to vector<2x20xf32>
    %282 = arith.addf %281, %280 : vector<2x20xf32>
    %283 = arith.divf %281, %282 : vector<2x20xf32>
    %284 = vector.extract_strided_slice %283 {offsets = [0, 0], sizes = [2, 10], strides = [1, 1]} : vector<2x20xf32> to vector<2x10xf32>
    %285 = vector.extract_strided_slice %283 {offsets = [0, 10], sizes = [2, 10], strides = [1, 1]} : vector<2x20xf32> to vector<2x10xf32>
    %286 = vector.extract_strided_slice %237 {offsets = [0, 20], sizes = [2, 10], strides = [1, 1]} : vector<2x30xf32> to vector<2x10xf32>
    %287 = vector.extract_strided_slice %276 {offsets = [0, 20], sizes = [2, 10], strides = [1, 1]} : vector<2x30xf32> to vector<2x10xf32>
    %288 = vector.broadcast %3 : vector<1x10xf32> to vector<2x10xf32>
    %289 = arith.addf %287, %288 : vector<2x10xf32>
    %290 = arith.mulf %284, %289 : vector<2x10xf32>
    %291 = arith.addf %286, %290 : vector<2x10xf32>
    %292 = math.tanh %291 : vector<2x10xf32>
    %cst_17 = arith.constant 1.000000e+00 : f32
    %293 = vector.broadcast %cst_17 : f32 to vector<2x10xf32>
    %294 = arith.subf %293, %285 : vector<2x10xf32>
    %295 = arith.mulf %294, %292 : vector<2x10xf32>
    %296 = arith.mulf %285, %236 : vector<2x10xf32>
    %297 = arith.addf %295, %296 : vector<2x10xf32>
    %298 = vector.extract_strided_slice %15 {offsets = [8, 0], sizes = [2, 30], strides = [1, 1]} : vector<16x30xf32> to vector<2x30xf32>
    %299 = vector.extract_strided_slice %297 {offsets = [0, 0], sizes = [2, 1], strides = [1, 1]} : vector<2x10xf32> to vector<2x1xf32>
    %300 = vector.broadcast %299 : vector<2x1xf32> to vector<2x30xf32>
    %301 = arith.mulf %300, %25 : vector<2x30xf32>
    %302 = vector.extract_strided_slice %297 {offsets = [0, 1], sizes = [2, 1], strides = [1, 1]} : vector<2x10xf32> to vector<2x1xf32>
    %303 = vector.broadcast %302 : vector<2x1xf32> to vector<2x30xf32>
    %304 = arith.mulf %303, %28 : vector<2x30xf32>
    %305 = vector.extract_strided_slice %297 {offsets = [0, 2], sizes = [2, 1], strides = [1, 1]} : vector<2x10xf32> to vector<2x1xf32>
    %306 = vector.broadcast %305 : vector<2x1xf32> to vector<2x30xf32>
    %307 = arith.mulf %306, %31 : vector<2x30xf32>
    %308 = arith.addf %301, %307 : vector<2x30xf32>
    %309 = vector.extract_strided_slice %297 {offsets = [0, 3], sizes = [2, 1], strides = [1, 1]} : vector<2x10xf32> to vector<2x1xf32>
    %310 = vector.broadcast %309 : vector<2x1xf32> to vector<2x30xf32>
    %311 = arith.mulf %310, %34 : vector<2x30xf32>
    %312 = arith.addf %304, %311 : vector<2x30xf32>
    %313 = vector.extract_strided_slice %297 {offsets = [0, 4], sizes = [2, 1], strides = [1, 1]} : vector<2x10xf32> to vector<2x1xf32>
    %314 = vector.broadcast %313 : vector<2x1xf32> to vector<2x30xf32>
    %315 = arith.mulf %314, %37 : vector<2x30xf32>
    %316 = arith.addf %308, %315 : vector<2x30xf32>
    %317 = vector.extract_strided_slice %297 {offsets = [0, 5], sizes = [2, 1], strides = [1, 1]} : vector<2x10xf32> to vector<2x1xf32>
    %318 = vector.broadcast %317 : vector<2x1xf32> to vector<2x30xf32>
    %319 = arith.mulf %318, %40 : vector<2x30xf32>
    %320 = arith.addf %312, %319 : vector<2x30xf32>
    %321 = vector.extract_strided_slice %297 {offsets = [0, 6], sizes = [2, 1], strides = [1, 1]} : vector<2x10xf32> to vector<2x1xf32>
    %322 = vector.broadcast %321 : vector<2x1xf32> to vector<2x30xf32>
    %323 = arith.mulf %322, %43 : vector<2x30xf32>
    %324 = arith.addf %316, %323 : vector<2x30xf32>
    %325 = vector.extract_strided_slice %297 {offsets = [0, 7], sizes = [2, 1], strides = [1, 1]} : vector<2x10xf32> to vector<2x1xf32>
    %326 = vector.broadcast %325 : vector<2x1xf32> to vector<2x30xf32>
    %327 = arith.mulf %326, %46 : vector<2x30xf32>
    %328 = arith.addf %320, %327 : vector<2x30xf32>
    %329 = vector.extract_strided_slice %297 {offsets = [0, 8], sizes = [2, 1], strides = [1, 1]} : vector<2x10xf32> to vector<2x1xf32>
    %330 = vector.broadcast %329 : vector<2x1xf32> to vector<2x30xf32>
    %331 = arith.mulf %330, %49 : vector<2x30xf32>
    %332 = arith.addf %324, %331 : vector<2x30xf32>
    %333 = vector.extract_strided_slice %297 {offsets = [0, 9], sizes = [2, 1], strides = [1, 1]} : vector<2x10xf32> to vector<2x1xf32>
    %334 = vector.broadcast %333 : vector<2x1xf32> to vector<2x30xf32>
    %335 = arith.mulf %334, %52 : vector<2x30xf32>
    %336 = arith.addf %328, %335 : vector<2x30xf32>
    %337 = arith.addf %332, %336 : vector<2x30xf32>
    %338 = arith.addf %298, %337 : vector<2x30xf32>
    %339 = vector.extract_strided_slice %338 {offsets = [0, 0], sizes = [2, 20], strides = [1, 1]} : vector<2x30xf32> to vector<2x20xf32>
    %340 = arith.negf %339 : vector<2x20xf32>
    %341 = math.exp %340 : vector<2x20xf32>
    %cst_18 = arith.constant 1.000000e+00 : f32
    %342 = vector.broadcast %cst_18 : f32 to vector<2x20xf32>
    %343 = arith.addf %342, %341 : vector<2x20xf32>
    %344 = arith.divf %342, %343 : vector<2x20xf32>
    %345 = vector.extract_strided_slice %344 {offsets = [0, 0], sizes = [2, 10], strides = [1, 1]} : vector<2x20xf32> to vector<2x10xf32>
    %346 = vector.extract_strided_slice %344 {offsets = [0, 10], sizes = [2, 10], strides = [1, 1]} : vector<2x20xf32> to vector<2x10xf32>
    %347 = vector.extract_strided_slice %298 {offsets = [0, 20], sizes = [2, 10], strides = [1, 1]} : vector<2x30xf32> to vector<2x10xf32>
    %348 = vector.extract_strided_slice %337 {offsets = [0, 20], sizes = [2, 10], strides = [1, 1]} : vector<2x30xf32> to vector<2x10xf32>
    %349 = vector.broadcast %3 : vector<1x10xf32> to vector<2x10xf32>
    %350 = arith.addf %348, %349 : vector<2x10xf32>
    %351 = arith.mulf %345, %350 : vector<2x10xf32>
    %352 = arith.addf %347, %351 : vector<2x10xf32>
    %353 = math.tanh %352 : vector<2x10xf32>
    %cst_19 = arith.constant 1.000000e+00 : f32
    %354 = vector.broadcast %cst_19 : f32 to vector<2x10xf32>
    %355 = arith.subf %354, %346 : vector<2x10xf32>
    %356 = arith.mulf %355, %353 : vector<2x10xf32>
    %357 = arith.mulf %346, %297 : vector<2x10xf32>
    %358 = arith.addf %356, %357 : vector<2x10xf32>
    %359 = vector.extract_strided_slice %15 {offsets = [10, 0], sizes = [2, 30], strides = [1, 1]} : vector<16x30xf32> to vector<2x30xf32>
    %360 = vector.extract_strided_slice %358 {offsets = [0, 0], sizes = [2, 1], strides = [1, 1]} : vector<2x10xf32> to vector<2x1xf32>
    %361 = vector.broadcast %360 : vector<2x1xf32> to vector<2x30xf32>
    %362 = arith.mulf %361, %25 : vector<2x30xf32>
    %363 = vector.extract_strided_slice %358 {offsets = [0, 1], sizes = [2, 1], strides = [1, 1]} : vector<2x10xf32> to vector<2x1xf32>
    %364 = vector.broadcast %363 : vector<2x1xf32> to vector<2x30xf32>
    %365 = arith.mulf %364, %28 : vector<2x30xf32>
    %366 = vector.extract_strided_slice %358 {offsets = [0, 2], sizes = [2, 1], strides = [1, 1]} : vector<2x10xf32> to vector<2x1xf32>
    %367 = vector.broadcast %366 : vector<2x1xf32> to vector<2x30xf32>
    %368 = arith.mulf %367, %31 : vector<2x30xf32>
    %369 = arith.addf %362, %368 : vector<2x30xf32>
    %370 = vector.extract_strided_slice %358 {offsets = [0, 3], sizes = [2, 1], strides = [1, 1]} : vector<2x10xf32> to vector<2x1xf32>
    %371 = vector.broadcast %370 : vector<2x1xf32> to vector<2x30xf32>
    %372 = arith.mulf %371, %34 : vector<2x30xf32>
    %373 = arith.addf %365, %372 : vector<2x30xf32>
    %374 = vector.extract_strided_slice %358 {offsets = [0, 4], sizes = [2, 1], strides = [1, 1]} : vector<2x10xf32> to vector<2x1xf32>
    %375 = vector.broadcast %374 : vector<2x1xf32> to vector<2x30xf32>
    %376 = arith.mulf %375, %37 : vector<2x30xf32>
    %377 = arith.addf %369, %376 : vector<2x30xf32>
    %378 = vector.extract_strided_slice %358 {offsets = [0, 5], sizes = [2, 1], strides = [1, 1]} : vector<2x10xf32> to vector<2x1xf32>
    %379 = vector.broadcast %378 : vector<2x1xf32> to vector<2x30xf32>
    %380 = arith.mulf %379, %40 : vector<2x30xf32>
    %381 = arith.addf %373, %380 : vector<2x30xf32>
    %382 = vector.extract_strided_slice %358 {offsets = [0, 6], sizes = [2, 1], strides = [1, 1]} : vector<2x10xf32> to vector<2x1xf32>
    %383 = vector.broadcast %382 : vector<2x1xf32> to vector<2x30xf32>
    %384 = arith.mulf %383, %43 : vector<2x30xf32>
    %385 = arith.addf %377, %384 : vector<2x30xf32>
    %386 = vector.extract_strided_slice %358 {offsets = [0, 7], sizes = [2, 1], strides = [1, 1]} : vector<2x10xf32> to vector<2x1xf32>
    %387 = vector.broadcast %386 : vector<2x1xf32> to vector<2x30xf32>
    %388 = arith.mulf %387, %46 : vector<2x30xf32>
    %389 = arith.addf %381, %388 : vector<2x30xf32>
    %390 = vector.extract_strided_slice %358 {offsets = [0, 8], sizes = [2, 1], strides = [1, 1]} : vector<2x10xf32> to vector<2x1xf32>
    %391 = vector.broadcast %390 : vector<2x1xf32> to vector<2x30xf32>
    %392 = arith.mulf %391, %49 : vector<2x30xf32>
    %393 = arith.addf %385, %392 : vector<2x30xf32>
    %394 = vector.extract_strided_slice %358 {offsets = [0, 9], sizes = [2, 1], strides = [1, 1]} : vector<2x10xf32> to vector<2x1xf32>
    %395 = vector.broadcast %394 : vector<2x1xf32> to vector<2x30xf32>
    %396 = arith.mulf %395, %52 : vector<2x30xf32>
    %397 = arith.addf %389, %396 : vector<2x30xf32>
    %398 = arith.addf %393, %397 : vector<2x30xf32>
    %399 = arith.addf %359, %398 : vector<2x30xf32>
    %400 = vector.extract_strided_slice %399 {offsets = [0, 0], sizes = [2, 20], strides = [1, 1]} : vector<2x30xf32> to vector<2x20xf32>
    %401 = arith.negf %400 : vector<2x20xf32>
    %402 = math.exp %401 : vector<2x20xf32>
    %cst_20 = arith.constant 1.000000e+00 : f32
    %403 = vector.broadcast %cst_20 : f32 to vector<2x20xf32>
    %404 = arith.addf %403, %402 : vector<2x20xf32>
    %405 = arith.divf %403, %404 : vector<2x20xf32>
    %406 = vector.extract_strided_slice %405 {offsets = [0, 0], sizes = [2, 10], strides = [1, 1]} : vector<2x20xf32> to vector<2x10xf32>
    %407 = vector.extract_strided_slice %405 {offsets = [0, 10], sizes = [2, 10], strides = [1, 1]} : vector<2x20xf32> to vector<2x10xf32>
    %408 = vector.extract_strided_slice %359 {offsets = [0, 20], sizes = [2, 10], strides = [1, 1]} : vector<2x30xf32> to vector<2x10xf32>
    %409 = vector.extract_strided_slice %398 {offsets = [0, 20], sizes = [2, 10], strides = [1, 1]} : vector<2x30xf32> to vector<2x10xf32>
    %410 = vector.broadcast %3 : vector<1x10xf32> to vector<2x10xf32>
    %411 = arith.addf %409, %410 : vector<2x10xf32>
    %412 = arith.mulf %406, %411 : vector<2x10xf32>
    %413 = arith.addf %408, %412 : vector<2x10xf32>
    %414 = math.tanh %413 : vector<2x10xf32>
    %cst_21 = arith.constant 1.000000e+00 : f32
    %415 = vector.broadcast %cst_21 : f32 to vector<2x10xf32>
    %416 = arith.subf %415, %407 : vector<2x10xf32>
    %417 = arith.mulf %416, %414 : vector<2x10xf32>
    %418 = arith.mulf %407, %358 : vector<2x10xf32>
    %419 = arith.addf %417, %418 : vector<2x10xf32>
    %420 = vector.extract_strided_slice %15 {offsets = [12, 0], sizes = [2, 30], strides = [1, 1]} : vector<16x30xf32> to vector<2x30xf32>
    %421 = vector.extract_strided_slice %419 {offsets = [0, 0], sizes = [2, 1], strides = [1, 1]} : vector<2x10xf32> to vector<2x1xf32>
    %422 = vector.broadcast %421 : vector<2x1xf32> to vector<2x30xf32>
    %423 = arith.mulf %422, %25 : vector<2x30xf32>
    %424 = vector.extract_strided_slice %419 {offsets = [0, 1], sizes = [2, 1], strides = [1, 1]} : vector<2x10xf32> to vector<2x1xf32>
    %425 = vector.broadcast %424 : vector<2x1xf32> to vector<2x30xf32>
    %426 = arith.mulf %425, %28 : vector<2x30xf32>
    %427 = vector.extract_strided_slice %419 {offsets = [0, 2], sizes = [2, 1], strides = [1, 1]} : vector<2x10xf32> to vector<2x1xf32>
    %428 = vector.broadcast %427 : vector<2x1xf32> to vector<2x30xf32>
    %429 = arith.mulf %428, %31 : vector<2x30xf32>
    %430 = arith.addf %423, %429 : vector<2x30xf32>
    %431 = vector.extract_strided_slice %419 {offsets = [0, 3], sizes = [2, 1], strides = [1, 1]} : vector<2x10xf32> to vector<2x1xf32>
    %432 = vector.broadcast %431 : vector<2x1xf32> to vector<2x30xf32>
    %433 = arith.mulf %432, %34 : vector<2x30xf32>
    %434 = arith.addf %426, %433 : vector<2x30xf32>
    %435 = vector.extract_strided_slice %419 {offsets = [0, 4], sizes = [2, 1], strides = [1, 1]} : vector<2x10xf32> to vector<2x1xf32>
    %436 = vector.broadcast %435 : vector<2x1xf32> to vector<2x30xf32>
    %437 = arith.mulf %436, %37 : vector<2x30xf32>
    %438 = arith.addf %430, %437 : vector<2x30xf32>
    %439 = vector.extract_strided_slice %419 {offsets = [0, 5], sizes = [2, 1], strides = [1, 1]} : vector<2x10xf32> to vector<2x1xf32>
    %440 = vector.broadcast %439 : vector<2x1xf32> to vector<2x30xf32>
    %441 = arith.mulf %440, %40 : vector<2x30xf32>
    %442 = arith.addf %434, %441 : vector<2x30xf32>
    %443 = vector.extract_strided_slice %419 {offsets = [0, 6], sizes = [2, 1], strides = [1, 1]} : vector<2x10xf32> to vector<2x1xf32>
    %444 = vector.broadcast %443 : vector<2x1xf32> to vector<2x30xf32>
    %445 = arith.mulf %444, %43 : vector<2x30xf32>
    %446 = arith.addf %438, %445 : vector<2x30xf32>
    %447 = vector.extract_strided_slice %419 {offsets = [0, 7], sizes = [2, 1], strides = [1, 1]} : vector<2x10xf32> to vector<2x1xf32>
    %448 = vector.broadcast %447 : vector<2x1xf32> to vector<2x30xf32>
    %449 = arith.mulf %448, %46 : vector<2x30xf32>
    %450 = arith.addf %442, %449 : vector<2x30xf32>
    %451 = vector.extract_strided_slice %419 {offsets = [0, 8], sizes = [2, 1], strides = [1, 1]} : vector<2x10xf32> to vector<2x1xf32>
    %452 = vector.broadcast %451 : vector<2x1xf32> to vector<2x30xf32>
    %453 = arith.mulf %452, %49 : vector<2x30xf32>
    %454 = arith.addf %446, %453 : vector<2x30xf32>
    %455 = vector.extract_strided_slice %419 {offsets = [0, 9], sizes = [2, 1], strides = [1, 1]} : vector<2x10xf32> to vector<2x1xf32>
    %456 = vector.broadcast %455 : vector<2x1xf32> to vector<2x30xf32>
    %457 = arith.mulf %456, %52 : vector<2x30xf32>
    %458 = arith.addf %450, %457 : vector<2x30xf32>
    %459 = arith.addf %454, %458 : vector<2x30xf32>
    %460 = arith.addf %420, %459 : vector<2x30xf32>
    %461 = vector.extract_strided_slice %460 {offsets = [0, 0], sizes = [2, 20], strides = [1, 1]} : vector<2x30xf32> to vector<2x20xf32>
    %462 = arith.negf %461 : vector<2x20xf32>
    %463 = math.exp %462 : vector<2x20xf32>
    %cst_22 = arith.constant 1.000000e+00 : f32
    %464 = vector.broadcast %cst_22 : f32 to vector<2x20xf32>
    %465 = arith.addf %464, %463 : vector<2x20xf32>
    %466 = arith.divf %464, %465 : vector<2x20xf32>
    %467 = vector.extract_strided_slice %466 {offsets = [0, 0], sizes = [2, 10], strides = [1, 1]} : vector<2x20xf32> to vector<2x10xf32>
    %468 = vector.extract_strided_slice %466 {offsets = [0, 10], sizes = [2, 10], strides = [1, 1]} : vector<2x20xf32> to vector<2x10xf32>
    %469 = vector.extract_strided_slice %420 {offsets = [0, 20], sizes = [2, 10], strides = [1, 1]} : vector<2x30xf32> to vector<2x10xf32>
    %470 = vector.extract_strided_slice %459 {offsets = [0, 20], sizes = [2, 10], strides = [1, 1]} : vector<2x30xf32> to vector<2x10xf32>
    %471 = vector.broadcast %3 : vector<1x10xf32> to vector<2x10xf32>
    %472 = arith.addf %470, %471 : vector<2x10xf32>
    %473 = arith.mulf %467, %472 : vector<2x10xf32>
    %474 = arith.addf %469, %473 : vector<2x10xf32>
    %475 = math.tanh %474 : vector<2x10xf32>
    %cst_23 = arith.constant 1.000000e+00 : f32
    %476 = vector.broadcast %cst_23 : f32 to vector<2x10xf32>
    %477 = arith.subf %476, %468 : vector<2x10xf32>
    %478 = arith.mulf %477, %475 : vector<2x10xf32>
    %479 = arith.mulf %468, %419 : vector<2x10xf32>
    %480 = arith.addf %478, %479 : vector<2x10xf32>
    %481 = vector.extract_strided_slice %15 {offsets = [14, 0], sizes = [2, 30], strides = [1, 1]} : vector<16x30xf32> to vector<2x30xf32>
    %482 = vector.extract_strided_slice %480 {offsets = [0, 0], sizes = [2, 1], strides = [1, 1]} : vector<2x10xf32> to vector<2x1xf32>
    %483 = vector.broadcast %482 : vector<2x1xf32> to vector<2x30xf32>
    %484 = arith.mulf %483, %25 : vector<2x30xf32>
    %485 = vector.extract_strided_slice %480 {offsets = [0, 1], sizes = [2, 1], strides = [1, 1]} : vector<2x10xf32> to vector<2x1xf32>
    %486 = vector.broadcast %485 : vector<2x1xf32> to vector<2x30xf32>
    %487 = arith.mulf %486, %28 : vector<2x30xf32>
    %488 = vector.extract_strided_slice %480 {offsets = [0, 2], sizes = [2, 1], strides = [1, 1]} : vector<2x10xf32> to vector<2x1xf32>
    %489 = vector.broadcast %488 : vector<2x1xf32> to vector<2x30xf32>
    %490 = arith.mulf %489, %31 : vector<2x30xf32>
    %491 = arith.addf %484, %490 : vector<2x30xf32>
    %492 = vector.extract_strided_slice %480 {offsets = [0, 3], sizes = [2, 1], strides = [1, 1]} : vector<2x10xf32> to vector<2x1xf32>
    %493 = vector.broadcast %492 : vector<2x1xf32> to vector<2x30xf32>
    %494 = arith.mulf %493, %34 : vector<2x30xf32>
    %495 = arith.addf %487, %494 : vector<2x30xf32>
    %496 = vector.extract_strided_slice %480 {offsets = [0, 4], sizes = [2, 1], strides = [1, 1]} : vector<2x10xf32> to vector<2x1xf32>
    %497 = vector.broadcast %496 : vector<2x1xf32> to vector<2x30xf32>
    %498 = arith.mulf %497, %37 : vector<2x30xf32>
    %499 = arith.addf %491, %498 : vector<2x30xf32>
    %500 = vector.extract_strided_slice %480 {offsets = [0, 5], sizes = [2, 1], strides = [1, 1]} : vector<2x10xf32> to vector<2x1xf32>
    %501 = vector.broadcast %500 : vector<2x1xf32> to vector<2x30xf32>
    %502 = arith.mulf %501, %40 : vector<2x30xf32>
    %503 = arith.addf %495, %502 : vector<2x30xf32>
    %504 = vector.extract_strided_slice %480 {offsets = [0, 6], sizes = [2, 1], strides = [1, 1]} : vector<2x10xf32> to vector<2x1xf32>
    %505 = vector.broadcast %504 : vector<2x1xf32> to vector<2x30xf32>
    %506 = arith.mulf %505, %43 : vector<2x30xf32>
    %507 = arith.addf %499, %506 : vector<2x30xf32>
    %508 = vector.extract_strided_slice %480 {offsets = [0, 7], sizes = [2, 1], strides = [1, 1]} : vector<2x10xf32> to vector<2x1xf32>
    %509 = vector.broadcast %508 : vector<2x1xf32> to vector<2x30xf32>
    %510 = arith.mulf %509, %46 : vector<2x30xf32>
    %511 = arith.addf %503, %510 : vector<2x30xf32>
    %512 = vector.extract_strided_slice %480 {offsets = [0, 8], sizes = [2, 1], strides = [1, 1]} : vector<2x10xf32> to vector<2x1xf32>
    %513 = vector.broadcast %512 : vector<2x1xf32> to vector<2x30xf32>
    %514 = arith.mulf %513, %49 : vector<2x30xf32>
    %515 = arith.addf %507, %514 : vector<2x30xf32>
    %516 = vector.extract_strided_slice %480 {offsets = [0, 9], sizes = [2, 1], strides = [1, 1]} : vector<2x10xf32> to vector<2x1xf32>
    %517 = vector.broadcast %516 : vector<2x1xf32> to vector<2x30xf32>
    %518 = arith.mulf %517, %52 : vector<2x30xf32>
    %519 = arith.addf %511, %518 : vector<2x30xf32>
    %520 = arith.addf %515, %519 : vector<2x30xf32>
    %521 = arith.addf %481, %520 : vector<2x30xf32>
    %522 = vector.extract_strided_slice %521 {offsets = [0, 0], sizes = [2, 20], strides = [1, 1]} : vector<2x30xf32> to vector<2x20xf32>
    %523 = arith.negf %522 : vector<2x20xf32>
    %524 = math.exp %523 : vector<2x20xf32>
    %cst_24 = arith.constant 1.000000e+00 : f32
    %525 = vector.broadcast %cst_24 : f32 to vector<2x20xf32>
    %526 = arith.addf %525, %524 : vector<2x20xf32>
    %527 = arith.divf %525, %526 : vector<2x20xf32>
    %528 = vector.extract_strided_slice %527 {offsets = [0, 0], sizes = [2, 10], strides = [1, 1]} : vector<2x20xf32> to vector<2x10xf32>
    %529 = vector.extract_strided_slice %527 {offsets = [0, 10], sizes = [2, 10], strides = [1, 1]} : vector<2x20xf32> to vector<2x10xf32>
    %530 = vector.extract_strided_slice %481 {offsets = [0, 20], sizes = [2, 10], strides = [1, 1]} : vector<2x30xf32> to vector<2x10xf32>
    %531 = vector.extract_strided_slice %520 {offsets = [0, 20], sizes = [2, 10], strides = [1, 1]} : vector<2x30xf32> to vector<2x10xf32>
    %532 = vector.broadcast %3 : vector<1x10xf32> to vector<2x10xf32>
    %533 = arith.addf %531, %532 : vector<2x10xf32>
    %534 = arith.mulf %528, %533 : vector<2x10xf32>
    %535 = arith.addf %530, %534 : vector<2x10xf32>
    %536 = math.tanh %535 : vector<2x10xf32>
    %cst_25 = arith.constant 1.000000e+00 : f32
    %537 = vector.broadcast %cst_25 : f32 to vector<2x10xf32>
    %538 = arith.subf %537, %529 : vector<2x10xf32>
    %539 = arith.mulf %538, %536 : vector<2x10xf32>
    %540 = arith.mulf %529, %480 : vector<2x10xf32>
    %541 = arith.addf %539, %540 : vector<2x10xf32>
    %542 = vector.extract_strided_slice %541 {offsets = [0, 0], sizes = [2, 1], strides = [1, 1]} : vector<2x10xf32> to vector<2x1xf32>
    %543 = vector.extract_strided_slice %18 {offsets = [0, 0], sizes = [1, 8], strides = [1, 1]} : vector<10x8xf32> to vector<1x8xf32>
    %544 = vector.broadcast %542 : vector<2x1xf32> to vector<2x8xf32>
    %545 = vector.broadcast %543 : vector<1x8xf32> to vector<2x8xf32>
    %546 = arith.mulf %544, %545 : vector<2x8xf32>
    %547 = vector.extract_strided_slice %541 {offsets = [0, 1], sizes = [2, 1], strides = [1, 1]} : vector<2x10xf32> to vector<2x1xf32>
    %548 = vector.extract_strided_slice %18 {offsets = [1, 0], sizes = [1, 8], strides = [1, 1]} : vector<10x8xf32> to vector<1x8xf32>
    %549 = vector.broadcast %547 : vector<2x1xf32> to vector<2x8xf32>
    %550 = vector.broadcast %548 : vector<1x8xf32> to vector<2x8xf32>
    %551 = arith.mulf %549, %550 : vector<2x8xf32>
    %552 = vector.extract_strided_slice %541 {offsets = [0, 2], sizes = [2, 1], strides = [1, 1]} : vector<2x10xf32> to vector<2x1xf32>
    %553 = vector.extract_strided_slice %18 {offsets = [2, 0], sizes = [1, 8], strides = [1, 1]} : vector<10x8xf32> to vector<1x8xf32>
    %554 = vector.broadcast %552 : vector<2x1xf32> to vector<2x8xf32>
    %555 = vector.broadcast %553 : vector<1x8xf32> to vector<2x8xf32>
    %556 = arith.mulf %554, %555 : vector<2x8xf32>
    %557 = arith.addf %546, %556 : vector<2x8xf32>
    %558 = vector.extract_strided_slice %541 {offsets = [0, 3], sizes = [2, 1], strides = [1, 1]} : vector<2x10xf32> to vector<2x1xf32>
    %559 = vector.extract_strided_slice %18 {offsets = [3, 0], sizes = [1, 8], strides = [1, 1]} : vector<10x8xf32> to vector<1x8xf32>
    %560 = vector.broadcast %558 : vector<2x1xf32> to vector<2x8xf32>
    %561 = vector.broadcast %559 : vector<1x8xf32> to vector<2x8xf32>
    %562 = arith.mulf %560, %561 : vector<2x8xf32>
    %563 = arith.addf %551, %562 : vector<2x8xf32>
    %564 = vector.extract_strided_slice %541 {offsets = [0, 4], sizes = [2, 1], strides = [1, 1]} : vector<2x10xf32> to vector<2x1xf32>
    %565 = vector.extract_strided_slice %18 {offsets = [4, 0], sizes = [1, 8], strides = [1, 1]} : vector<10x8xf32> to vector<1x8xf32>
    %566 = vector.broadcast %564 : vector<2x1xf32> to vector<2x8xf32>
    %567 = vector.broadcast %565 : vector<1x8xf32> to vector<2x8xf32>
    %568 = arith.mulf %566, %567 : vector<2x8xf32>
    %569 = arith.addf %557, %568 : vector<2x8xf32>
    %570 = vector.extract_strided_slice %541 {offsets = [0, 5], sizes = [2, 1], strides = [1, 1]} : vector<2x10xf32> to vector<2x1xf32>
    %571 = vector.extract_strided_slice %18 {offsets = [5, 0], sizes = [1, 8], strides = [1, 1]} : vector<10x8xf32> to vector<1x8xf32>
    %572 = vector.broadcast %570 : vector<2x1xf32> to vector<2x8xf32>
    %573 = vector.broadcast %571 : vector<1x8xf32> to vector<2x8xf32>
    %574 = arith.mulf %572, %573 : vector<2x8xf32>
    %575 = arith.addf %563, %574 : vector<2x8xf32>
    %576 = vector.extract_strided_slice %541 {offsets = [0, 6], sizes = [2, 1], strides = [1, 1]} : vector<2x10xf32> to vector<2x1xf32>
    %577 = vector.extract_strided_slice %18 {offsets = [6, 0], sizes = [1, 8], strides = [1, 1]} : vector<10x8xf32> to vector<1x8xf32>
    %578 = vector.broadcast %576 : vector<2x1xf32> to vector<2x8xf32>
    %579 = vector.broadcast %577 : vector<1x8xf32> to vector<2x8xf32>
    %580 = arith.mulf %578, %579 : vector<2x8xf32>
    %581 = arith.addf %569, %580 : vector<2x8xf32>
    %582 = vector.extract_strided_slice %541 {offsets = [0, 7], sizes = [2, 1], strides = [1, 1]} : vector<2x10xf32> to vector<2x1xf32>
    %583 = vector.extract_strided_slice %18 {offsets = [7, 0], sizes = [1, 8], strides = [1, 1]} : vector<10x8xf32> to vector<1x8xf32>
    %584 = vector.broadcast %582 : vector<2x1xf32> to vector<2x8xf32>
    %585 = vector.broadcast %583 : vector<1x8xf32> to vector<2x8xf32>
    %586 = arith.mulf %584, %585 : vector<2x8xf32>
    %587 = arith.addf %575, %586 : vector<2x8xf32>
    %588 = vector.extract_strided_slice %541 {offsets = [0, 8], sizes = [2, 1], strides = [1, 1]} : vector<2x10xf32> to vector<2x1xf32>
    %589 = vector.extract_strided_slice %18 {offsets = [8, 0], sizes = [1, 8], strides = [1, 1]} : vector<10x8xf32> to vector<1x8xf32>
    %590 = vector.broadcast %588 : vector<2x1xf32> to vector<2x8xf32>
    %591 = vector.broadcast %589 : vector<1x8xf32> to vector<2x8xf32>
    %592 = arith.mulf %590, %591 : vector<2x8xf32>
    %593 = arith.addf %581, %592 : vector<2x8xf32>
    %594 = vector.extract_strided_slice %541 {offsets = [0, 9], sizes = [2, 1], strides = [1, 1]} : vector<2x10xf32> to vector<2x1xf32>
    %595 = vector.extract_strided_slice %18 {offsets = [9, 0], sizes = [1, 8], strides = [1, 1]} : vector<10x8xf32> to vector<1x8xf32>
    %596 = vector.broadcast %594 : vector<2x1xf32> to vector<2x8xf32>
    %597 = vector.broadcast %595 : vector<1x8xf32> to vector<2x8xf32>
    %598 = arith.mulf %596, %597 : vector<2x8xf32>
    %599 = arith.addf %587, %598 : vector<2x8xf32>
    %600 = arith.addf %22, %593 : vector<2x8xf32>
    %601 = arith.addf %600, %599 : vector<2x8xf32>
    %cst_26 = arith.constant dense<0xFF800000> : vector<2xf32>
    %602 = vector.multi_reduction <maximumf>, %601, %cst_26 [1] : vector<2x8xf32> to vector<2xf32>
    %603 = vector.shape_cast %602 : vector<2xf32> to vector<2x1xf32>
    %604 = vector.broadcast %603 : vector<2x1xf32> to vector<2x8xf32>
    %605 = arith.subf %601, %604 : vector<2x8xf32>
    %606 = math.exp %605 : vector<2x8xf32>
    %cst_27 = arith.constant dense<0.000000e+00> : vector<2xf32>
    %607 = vector.multi_reduction <add>, %606, %cst_27 [1] : vector<2x8xf32> to vector<2xf32>
    %608 = vector.shape_cast %607 : vector<2xf32> to vector<2x1xf32>
    %609 = tpu.reciprocal %608 {approx = true} : vector<2x1xf32> -> vector<2x1xf32>
    %610 = vector.broadcast %609 : vector<2x1xf32> to vector<2x8xf32>
    %611 = arith.mulf %606, %610 : vector<2x8xf32>
    %c0_28 = arith.constant 0 : index
    %c0_29 = arith.constant 0 : index
    %612 = vector.load %arg4[%c0_28, %c0_29] : memref<2x8xf32, #tpu.memory_space<vmem>>, vector<2x8xf32>
    tpu.vector_store %arg4[%c0_28, %c0_29], %611 {strides = array<i32>} : memref<2x8xf32, #tpu.memory_space<vmem>>, vector<2x8xf32>,
    return
  }
}

</mosaic_0001>

<llo_original>
// kernel: tpu_custom_call.1
$region0: #{tpu_custom_call.1}
  #allocation0 [shape = 'u32[]', space=smem, size = 0x4, offset = 0x4, fixed_abs, tag = 'smem constant byte address 0x4 - core index']
  #allocation1 [shape = 'u32[144,128]{1,0:T(1,128)}', space=vmem, size = 0x12000, scoped, tag = 'internal scratch']
  %s0 = inlined_call_operand.vmem [shape: f32[18,4], index: 0, kind: input, shape index: {}]
  %s1 = inlined_call_operand.vmem [shape: f32[4,40], index: 1, kind: input, shape index: {}]
  %s2 = inlined_call_operand.vmem [shape: f32[10,46], index: 2, kind: input, shape index: {}]
  %s3 = inlined_call_operand.vmem [shape: f32[1,64], index: 3, kind: input, shape index: {}]
  %s4 = inlined_call_operand.hbm [shape: f32[2,8], index: 4, kind: output, shape index: {}]
  %s5 = sld [smem:[#allocation0]]
  $region26: #{tpu_custom_call.1} parent=0
    _
  %s7 = ssub.s32 1, %s5
  %s8 = scalar_select 0, %s7, %s5
  $region1: #{tpu_custom_call.1} parent=0
    #allocation2 [shape = 'u8[1024]{0}', space=vmem, size = 0x400, scoped, tag = 'output window, operand 0, single buffered']
    #allocation3 [shape = 's32[1]{0}', space=sflag, size = 0x4, scoped, tag = 'scoped memory for tpu_custom_call.1']
    %9 = vsyncpa [#allocation3], 0
    // Predicated region
    $region2: #{tpu_custom_call.1} parent=1 // pred_check
      _
    $region3: #{tpu_custom_call.1} parent=1 // pred_check_branch
      %11 = sbr.rel (0) target = $region5
    $region4: #{tpu_custom_call.1} parent=1 // pred_region
      _
    $region5: #{tpu_custom_call.1} parent=1 // pred_fallthru
      _
    // Predicated region
    $region6: #{tpu_custom_call.1} parent=1 // pred_check
      _
    $region7: #{tpu_custom_call.1} parent=1 // pred_check_branch
      %13 = sbr.rel (0) target = $region9
    $region8: #{tpu_custom_call.1} parent=1 // pred_region
      _
    $region9: #{tpu_custom_call.1} parent=1 // pred_fallthru
      _
    // Predicated region
    $region10: #{tpu_custom_call.1} parent=1 // pred_check
      _
    $region11: #{tpu_custom_call.1} parent=1 // pred_check_branch
      %15 = sbr.rel (0) target = $region13
    $region12: #{tpu_custom_call.1} parent=1 // pred_region
      _
    $region13: #{tpu_custom_call.1} parent=1 // pred_fallthru
      _
    // Predicated region
    $region14: #{tpu_custom_call.1} parent=1 // pred_check
      _
    $region15: #{tpu_custom_call.1} parent=1 // pred_check_branch
      %17 = sbr.rel (0) target = $region17
    $region16: #{tpu_custom_call.1} parent=1 // pred_region
      _
    $region17: #{tpu_custom_call.1} parent=1 // pred_fallthru
      _
    %v18 = vld [vmem:[%s3] sm:$0x1]
    %v19 = vld [vmem:[%s0] sm:$0xff]
    %v20 = vld [vmem:[%s0 + $0x8] sm:$0xff]
    %v21 = vld [vmem:[%s0 + $0x10] sm:$0x3]
    %v22 = vld [vmem:[%s1] sm:$0xf]
    %vm23 = vcmask 31744
    %v25 = vsel %vm23, %v19, 0
    %v28 = vsel %vm23, %v20, 0
    %v31 = vsel %vm23, %v21, 0
    %vm33 = vcmask 1043456
    %v35 = vsel %vm33, %v22, 0
    %37 = vmatprep.subr.mxu0 0.0
    %38 = vmatpush1.msra.mxu0 %v35
    %39 = vmatprep.subr.mxu0 0.0
    %40 = vmatpush1.msra.mxu0 0.0
    %41 = vmatprep.subr.mxu0 0.0
    %42 = vmatpush1.msra.mxu0 0.0
    %43 = vmatprep.subr.mxu0 0.0
    %44 = vmatpush1.msra.mxu0 0.0
    %45 = vmatprep.subr.mxu0 0.0
    %46 = vmatpush1.msra.mxu0 0.0
    %47 = vmatprep.subr.mxu0 0.0
    %48 = vmatpush1.msra.mxu0 0.0
    %49 = vmatprep.subr.mxu0 0.0
    %50 = vmatpush1.msra.mxu0 0.0
    %51 = vmatprep.subr.mxu0 0.0
    %52 = vmatpush1.msra.mxu0 0.0
    %53 = vmatprep.subr.mxu0 0.0
    %54 = vmatpush1.msra.mxu0 0.0
    %55 = vmatprep.subr.mxu0 0.0
    %56 = vmatpush1.msra.mxu0 0.0
    %57 = vmatprep.subr.mxu0 0.0
    %58 = vmatpush1.msra.mxu0 0.0
    %59 = vmatprep.subr.mxu0 0.0
    %60 = vmatpush1.msra.mxu0 0.0
    %61 = vmatprep.subr.mxu0 0.0
    %62 = vmatpush1.msra.mxu0 0.0
    %63 = vmatprep.subr.mxu0 0.0
    %64 = vmatpush1.msra.mxu0 0.0
    %65 = vmatprep.subr.mxu0 0.0
    %66 = vmatpush1.msra.mxu0 0.0
    %67 = vmatprep.subr.mxu0 0.0
    %68 = vmatpush1.msra.mxu0 0.0
    %69 = vmatprep.subr.mxu0 0.0
    %70 = vmatpush1.msra.mxu0 0.0
    %71 = vmatprep.subr.mxu0 0.0
    %72 = vmatpush1.msra.mxu0 0.0
    %73 = vmatprep.subr.mxu0 0.0
    %74 = vmatpush1.msra.mxu0 0.0
    %75 = vmatprep.subr.mxu0 0.0
    %76 = vmatpush1.msra.mxu0 0.0
    %77 = vmatprep.subr.mxu0 0.0
    %78 = vmatpush1.msra.mxu0 0.0
    %79 = vmatprep.subr.mxu0 0.0
    %80 = vmatpush1.msra.mxu0 0.0
    %81 = vmatprep.subr.mxu0 0.0
    %82 = vmatpush1.msra.mxu0 0.0
    %83 = vmatprep.subr.mxu0 0.0
    %84 = vmatpush1.msra.mxu0 0.0
    %85 = vmatprep.subr.mxu0 0.0
    %86 = vmatpush1.msra.mxu0 0.0
    %87 = vmatprep.subr.mxu0 0.0
    %88 = vmatpush1.msra.mxu0 0.0
    %89 = vmatprep.subr.mxu0 0.0
    %90 = vmatpush1.msra.mxu0 0.0
    %91 = vmatprep.subr.mxu0 0.0
    %92 = vmatpush1.msra.mxu0 0.0
    %93 = vmatprep.subr.mxu0 0.0
    %94 = vmatpush1.msra.mxu0 0.0
    %95 = vmatprep.subr.mxu0 0.0
    %96 = vmatpush1.msra.mxu0 0.0
    %97 = vmatprep.subr.mxu0 0.0
    %98 = vmatpush1.msra.mxu0 0.0
    %99 = vmatprep.subr.mxu0 0.0
    %100 = vmatpush1.msra.mxu0 0.0
    %101 = vmatprep.mubr.f32.mxu0 0.0
    %102 = vmatmul.mubr.f32.gmra.mrb[0].mxu0 %v25
    %v103 = vpop.f32.mrb[0].mxu0
    %v104 = vadd.f32 0.0, %v103
    %v105 = vpop.f32.mrb[0].mxu0
    %106 = vmatprep.mubr.f32.mxu0 0.0
    %107 = vmatmul.mubr.f32.gmra.mrb[0].mxu0 %v28
    %v108 = vpop.f32.mrb[0].mxu0
    %v109 = vadd.f32 0.0, %v108
    %v110 = vpop.f32.mrb[0].mxu0
    %111 = vmatprep.mubr.f32.mxu0 0.0
    %112 = vmatmul.mubr.f32.gmra.mrb[0].mxu0 %v31
    %v113 = vpop.f32.mrb[0].mxu0
    %v114 = vadd.f32 0.0, %v113
    %v115 = vpop.f32.mrb[0].mxu0
    %116 = vdwg.mxu0
    %v118 = vlaneseq
    %v119 = vshrl.u32 %v118, 7
    %v120 = vsub.s32 0, %v119
    %v121 = vrot.slane %v18, %v120
    %v123 = vadd.f32 %v104, %v121
    %v124 = vmax.f32 %v123, 0.0
    %v125 = vadd.f32 %v109, %v121
    %v126 = vadd.f32 %v114, %v121
    %v127 = vld [vmem:[%s2] sm:$0xff]
    %v128 = vld [vmem:[%s2 + $0x8] sm:$0x3]
    %131 = vrot.lane.b32.xlu0 %v127, 90
    %v132 = vpop.permute.xlu0 %131
    %133 = vrot.lane.b32.xlu0 %v128, 90
    %v134 = vpop.permute.xlu0 %133
    %136 = vrot.lane.b32.xlu0 %v121, 78
    %v137 = vpop.permute.xlu0 %136
    %vm139 = vcmask 80896
    %v141 = vsel %vm139, %v124, 0
    %vm143 = vcmask 1041408
    %v144 = vsel %vm143, %v134, 0
    %146 = vmatprep.subr.mxu0 0.0
    %147 = vmatpush1.msra.mxu0 %v132
    %148 = vmatprep.subr.mxu0 0.0
    %149 = vmatpush1.msra.mxu0 %v144
    %150 = vmatprep.subr.mxu0 0.0
    %151 = vmatpush1.msra.mxu0 0.0
    %152 = vmatprep.subr.mxu0 0.0
    %153 = vmatpush1.msra.mxu0 0.0
    %154 = vmatprep.subr.mxu0 0.0
    %155 = vmatpush1.msra.mxu0 0.0
    %156 = vmatprep.subr.mxu0 0.0
    %157 = vmatpush1.msra.mxu0 0.0
    %158 = vmatprep.subr.mxu0 0.0
    %159 = vmatpush1.msra.mxu0 0.0
    %160 = vmatprep.subr.mxu0 0.0
    %161 = vmatpush1.msra.mxu0 0.0
    %162 = vmatprep.subr.mxu0 0.0
    %163 = vmatpush1.msra.mxu0 0.0
    %164 = vmatprep.subr.mxu0 0.0
    %165 = vmatpush1.msra.mxu0 0.0
    %166 = vmatprep.subr.mxu0 0.0
    %167 = vmatpush1.msra.mxu0 0.0
    %168 = vmatprep.subr.mxu0 0.0
    %169 = vmatpush1.msra.mxu0 0.0
    %170 = vmatprep.subr.mxu0 0.0
    %171 = vmatpush1.msra.mxu0 0.0
    %172 = vmatprep.subr.mxu0 0.0
    %173 = vmatpush1.msra.mxu0 0.0
    %174 = vmatprep.subr.mxu0 0.0
    %175 = vmatpush1.msra.mxu0 0.0
    %176 = vmatprep.subr.mxu0 0.0
    %177 = vmatpush1.msra.mxu0 0.0
    %178 = vmatprep.subr.mxu0 0.0
    %179 = vmatpush1.msra.mxu0 0.0
    %180 = vmatprep.subr.mxu0 0.0
    %181 = vmatpush1.msra.mxu0 0.0
    %182 = vmatprep.subr.mxu0 0.0
    %183 = vmatpush1.msra.mxu0 0.0
    %184 = vmatprep.subr.mxu0 0.0
    %185 = vmatpush1.msra.mxu0 0.0
    %186 = vmatprep.subr.mxu0 0.0
    %187 = vmatpush1.msra.mxu0 0.0
    %188 = vmatprep.subr.mxu0 0.0
    %189 = vmatpush1.msra.mxu0 0.0
    %190 = vmatprep.subr.mxu0 0.0
    %191 = vmatpush1.msra.mxu0 0.0
    %192 = vmatprep.subr.mxu0 0.0
    %193 = vmatpush1.msra.mxu0 0.0
    %194 = vmatprep.subr.mxu0 0.0
    %195 = vmatpush1.msra.mxu0 0.0
    %196 = vmatprep.subr.mxu0 0.0
    %197 = vmatpush1.msra.mxu0 0.0
    %198 = vmatprep.subr.mxu0 0.0
    %199 = vmatpush1.msra.mxu0 0.0
    %200 = vmatprep.subr.mxu0 0.0
    %201 = vmatpush1.msra.mxu0 0.0
    %202 = vmatprep.subr.mxu0 0.0
    %203 = vmatpush1.msra.mxu0 0.0
    %204 = vmatprep.subr.mxu0 0.0
    %205 = vmatpush1.msra.mxu0 0.0
    %206 = vmatprep.subr.mxu0 0.0
    %207 = vmatpush1.msra.mxu0 0.0
    %208 = vmatprep.subr.mxu0 0.0
    %209 = vmatpush1.msra.mxu0 0.0
    %210 = vmatprep.mubr.f32.mxu0 0.0
    %211 = vmatmul.mubr.f32.gmra.mrb[0].mxu0 %v141
    %v212 = vpop.f32.mrb[0].mxu0
    %v213 = vadd.f32 %v137, %v212
    %v214 = vpop.f32.mrb[0].mxu0
    %215 = vdwg.mxu0
    %v216 = vlaneseq
    %v217 = vshrl.u32 %v216, 7
    %v218 = vsub.s32 0, %v217
    %v219 = vrot.slane %v127, %v218
    %v220 = vlaneseq
    %v221 = vshrl.u32 %v220, 7
    %v222 = vsub.s32 1, %v221
    %v223 = vrot.slane %v127, %v222
    %v224 = vlaneseq
    %v225 = vshrl.u32 %v224, 7
    %v226 = vsub.s32 2, %v225
    %v227 = vrot.slane %v127, %v226
    %v228 = vlaneseq
    %v229 = vshrl.u32 %v228, 7
    %v230 = vsub.s32 3, %v229
    %v231 = vrot.slane %v127, %v230
    %v232 = vlaneseq
    %v233 = vshrl.u32 %v232, 7
    %v234 = vsub.s32 4, %v233
    %v235 = vrot.slane %v127, %v234
    %v236 = vlaneseq
    %v237 = vshrl.u32 %v236, 7
    %v238 = vsub.s32 5, %v237
    %v239 = vrot.slane %v127, %v238
    %v240 = vlaneseq
    %v241 = vshrl.u32 %v240, 7
    %v242 = vsub.s32 6, %v241
    %v243 = vrot.slane %v127, %v242
    %v244 = vlaneseq
    %v245 = vshrl.u32 %v244, 7
    %v246 = vsub.s32 7, %v245
    %v247 = vrot.slane %v127, %v246
    %v248 = vlaneseq
    %v249 = vshrl.u32 %v248, 7
    %v250 = vsub.s32 0, %v249
    %v251 = vrot.slane %v128, %v250
    %v252 = vlaneseq
    %v253 = vshrl.u32 %v252, 7
    %v254 = vsub.s32 1, %v253
    %v255 = vrot.slane %v128, %v254
    %v256 = vmul.f32 %v219, 0.0
    %v257 = vmul.f32 %v223, 0.0
    %v258 = vmul.f32 %v227, 0.0
    %v259 = vadd.f32 %v256, %v258
    %v260 = vmul.f32 %v231, 0.0
    %v261 = vadd.f32 %v257, %v260
    %v262 = vmul.f32 %v235, 0.0
    %v263 = vadd.f32 %v259, %v262
    %v264 = vmul.f32 %v239, 0.0
    %v265 = vadd.f32 %v261, %v264
    %v266 = vmul.f32 %v243, 0.0
    %v267 = vadd.f32 %v263, %v266
    %v268 = vmul.f32 %v247, 0.0
    %v269 = vadd.f32 %v265, %v268
    %v270 = vmul.f32 %v251, 0.0
    %v271 = vadd.f32 %v267, %v270
    %v272 = vmul.f32 %v255, 0.0
    %v273 = vadd.f32 %v269, %v272
    %v274 = vadd.f32 %v271, %v273
    %276 = vrot.lane.b32.xlu0 %v274, 10
    %v277 = vpop.permute.xlu0 %276
    %v279 = vadd.f32 %v123, %v277
    %v280 = vxor.u32 %v279, 2147483648
    %v281 = vmul.f32 %v280, 1.442695
    %v282 = vpow.pop %v281
    %v283 = vadd.f32 %v282, 1.0
    %v284 = vrcp.pop %v283
    %v285 = vmul.f32 1.0, %v284
    %286 = vrot.lane.b32.xlu0 %v121, 108
    %v287 = vpop.permute.xlu0 %286
    %v289 = vadd.f32 %v274, %v287
    %v291 = vrot.slane %v289, 6
    %292 = vrot.lane.b32.xlu0 %v291, 118
    %v293 = vpop.permute.xlu0 %292
    %v295 = vmul.f32 %v285, %v293
    %297 = vrot.lane.b32.xlu0 %v295, 20
    %v298 = vpop.permute.xlu0 %297
    %v300 = vadd.f32 %v123, %v298
    %v301 = vtanh.pop %v300
    %v302 = vsub.f32 1.0, %v285
    %304 = vrot.lane.b32.xlu0 %v301, 118
    %v305 = vpop.permute.xlu0 %304
    %v307 = vmul.f32 %v302, %v305
    %v308 = vmul.f32 %v285, 0.0
    %v309 = vadd.f32 %v307, %v308
    %311 = vset.pattern.permute.xlu0 20
    %312 = vperm.xlu0 %311, %v309
    %v313 = vpop.permute.xlu0 %312
    %v315 = vmul.f32 %v313, %v219
    %316 = vset.pattern.permute.xlu0 21
    %317 = vperm.xlu0 %316, %v309
    %v318 = vpop.permute.xlu0 %317
    %v320 = vmul.f32 %v318, %v223
    %321 = vset.pattern.permute.xlu0 22
    %322 = vperm.xlu0 %321, %v309
    %v323 = vpop.permute.xlu0 %322
    %v325 = vmul.f32 %v323, %v227
    %v326 = vadd.f32 %v315, %v325
    %327 = vset.pattern.permute.xlu0 23
    %328 = vperm.xlu0 %327, %v309
    %v329 = vpop.permute.xlu0 %328
    %v331 = vmul.f32 %v329, %v231
    %v332 = vadd.f32 %v320, %v331
    %333 = vset.pattern.permute.xlu0 24
    %334 = vperm.xlu0 %333, %v309
    %v335 = vpop.permute.xlu0 %334
    %v337 = vmul.f32 %v335, %v235
    %v338 = vadd.f32 %v326, %v337
    %339 = vset.pattern.permute.xlu0 25
    %340 = vperm.xlu0 %339, %v309
    %v341 = vpop.permute.xlu0 %340
    %v343 = vmul.f32 %v341, %v239
    %v344 = vadd.f32 %v332, %v343
    %345 = vset.pattern.permute.xlu0 26
    %346 = vperm.xlu0 %345, %v309
    %v347 = vpop.permute.xlu0 %346
    %v349 = vmul.f32 %v347, %v243
    %v350 = vadd.f32 %v338, %v349
    %351 = vset.pattern.permute.xlu0 27
    %352 = vperm.xlu0 %351, %v309
    %v353 = vpop.permute.xlu0 %352
    %v355 = vmul.f32 %v353, %v247
    %v356 = vadd.f32 %v344, %v355
    %357 = vset.pattern.permute.xlu0 28
    %358 = vperm.xlu0 %357, %v309
    %v359 = vpop.permute.xlu0 %358
    %v361 = vmul.f32 %v359, %v251
    %v362 = vadd.f32 %v350, %v361
    %363 = vset.pattern.permute.xlu0 29
    %364 = vperm.xlu0 %363, %v309
    %v365 = vpop.permute.xlu0 %364
    %v367 = vmul.f32 %v365, %v255
    %v368 = vadd.f32 %v356, %v367
    %v369 = vadd.f32 %v362, %v368
    %v371 = vrot.slane %v369, 6
    %372 = vrot.lane.b32.xlu0 %v371, 10
    %v373 = vpop.permute.xlu0 %372
    %v375 = vadd.f32 %v123, %v373
    %v376 = vxor.u32 %v375, 2147483648
    %v377 = vmul.f32 %v376, 1.442695
    %v378 = vpow.pop %v377
    %v379 = vadd.f32 %v378, 1.0
    %v380 = vrcp.pop %v379
    %v381 = vmul.f32 1.0, %v380
    %v382 = vadd.f32 %v369, %v287
    %v384 = vrot.slane %v382, 6
    %385 = vrot.lane.b32.xlu0 %v384, 118
    %v386 = vpop.permute.xlu0 %385
    %v388 = vmul.f32 %v381, %v386
    %390 = vrot.lane.b32.xlu0 %v388, 20
    %v391 = vpop.permute.xlu0 %390
    %v393 = vadd.f32 %v123, %v391
    %v394 = vtanh.pop %v393
    %v395 = vsub.f32 1.0, %v381
    %397 = vrot.lane.b32.xlu0 %v394, 118
    %v398 = vpop.permute.xlu0 %397
    %v400 = vmul.f32 %v395, %v398
    %v401 = vrot.slane %v309, 6
    %v403 = vmul.f32 %v381, %v401
    %v404 = vadd.f32 %v400, %v403
    %406 = vset.pattern.permute.xlu0 20
    %407 = vperm.xlu0 %406, %v404
    %v408 = vpop.permute.xlu0 %407
    %v410 = vmul.f32 %v408, %v219
    %411 = vset.pattern.permute.xlu0 21
    %412 = vperm.xlu0 %411, %v404
    %v413 = vpop.permute.xlu0 %412
    %v415 = vmul.f32 %v413, %v223
    %416 = vset.pattern.permute.xlu0 22
    %417 = vperm.xlu0 %416, %v404
    %v418 = vpop.permute.xlu0 %417
    %v420 = vmul.f32 %v418, %v227
    %v421 = vadd.f32 %v410, %v420
    %422 = vset.pattern.permute.xlu0 23
    %423 = vperm.xlu0 %422, %v404
    %v424 = vpop.permute.xlu0 %423
    %v426 = vmul.f32 %v424, %v231
    %v427 = vadd.f32 %v415, %v426
    %428 = vset.pattern.permute.xlu0 24
    %429 = vperm.xlu0 %428, %v404
    %v430 = vpop.permute.xlu0 %429
    %v432 = vmul.f32 %v430, %v235
    %v433 = vadd.f32 %v421, %v432
    %434 = vset.pattern.permute.xlu0 25
    %435 = vperm.xlu0 %434, %v404
    %v436 = vpop.permute.xlu0 %435
    %v438 = vmul.f32 %v436, %v239
    %v439 = vadd.f32 %v427, %v438
    %440 = vset.pattern.permute.xlu0 26
    %441 = vperm.xlu0 %440, %v404
    %v442 = vpop.permute.xlu0 %441
    %v444 = vmul.f32 %v442, %v243
    %v445 = vadd.f32 %v433, %v444
    %446 = vset.pattern.permute.xlu0 27
    %447 = vperm.xlu0 %446, %v404
    %v448 = vpop.permute.xlu0 %447
    %v450 = vmul.f32 %v448, %v247
    %v451 = vadd.f32 %v439, %v450
    %452 = vset.pattern.permute.xlu0 28
    %453 = vperm.xlu0 %452, %v404
    %v454 = vpop.permute.xlu0 %453
    %v456 = vmul.f32 %v454, %v251
    %v457 = vadd.f32 %v445, %v456
    %458 = vset.pattern.permute.xlu0 29
    %459 = vperm.xlu0 %458, %v404
    %v460 = vpop.permute.xlu0 %459
    %v462 = vmul.f32 %v460, %v255
    %v463 = vadd.f32 %v451, %v462
    %v464 = vadd.f32 %v457, %v463
    %v466 = vrot.slane %v464, 6
    %467 = vrot.lane.b32.xlu0 %v466, 10
    %v468 = vpop.permute.xlu0 %467
    %v470 = vadd.f32 %v123, %v468
    %v471 = vxor.u32 %v470, 2147483648
    %v472 = vmul.f32 %v471, 1.442695
    %v473 = vpow.pop %v472
    %v474 = vadd.f32 %v473, 1.0
    %v475 = vrcp.pop %v474
    %v476 = vmul.f32 1.0, %v475
    %v477 = vadd.f32 %v464, %v287
    %v479 = vrot.slane %v477, 6
    %480 = vrot.lane.b32.xlu0 %v479, 118
    %v481 = vpop.permute.xlu0 %480
    %v483 = vmul.f32 %v476, %v481
    %485 = vrot.lane.b32.xlu0 %v483, 20
    %v486 = vpop.permute.xlu0 %485
    %v488 = vadd.f32 %v123, %v486
    %v489 = vtanh.pop %v488
    %v490 = vsub.f32 1.0, %v476
    %492 = vrot.lane.b32.xlu0 %v489, 118
    %v493 = vpop.permute.xlu0 %492
    %v495 = vmul.f32 %v490, %v493
    %v496 = vrot.slane %v404, 6
    %v498 = vmul.f32 %v476, %v496
    %v499 = vadd.f32 %v495, %v498
    %501 = vset.pattern.permute.xlu0 20
    %502 = vperm.xlu0 %501, %v499
    %v503 = vpop.permute.xlu0 %502
    %v505 = vmul.f32 %v503, %v219
    %506 = vset.pattern.permute.xlu0 21
    %507 = vperm.xlu0 %506, %v499
    %v508 = vpop.permute.xlu0 %507
    %v510 = vmul.f32 %v508, %v223
    %511 = vset.pattern.permute.xlu0 22
    %512 = vperm.xlu0 %511, %v499
    %v513 = vpop.permute.xlu0 %512
    %v515 = vmul.f32 %v513, %v227
    %v516 = vadd.f32 %v505, %v515
    %517 = vset.pattern.permute.xlu0 23
    %518 = vperm.xlu0 %517, %v499
    %v519 = vpop.permute.xlu0 %518
    %v521 = vmul.f32 %v519, %v231
    %v522 = vadd.f32 %v510, %v521
    %523 = vset.pattern.permute.xlu0 24
    %524 = vperm.xlu0 %523, %v499
    %v525 = vpop.permute.xlu0 %524
    %v527 = vmul.f32 %v525, %v235
    %v528 = vadd.f32 %v516, %v527
    %529 = vset.pattern.permute.xlu0 25
    %530 = vperm.xlu0 %529, %v499
    %v531 = vpop.permute.xlu0 %530
    %v533 = vmul.f32 %v531, %v239
    %v534 = vadd.f32 %v522, %v533
    %535 = vset.pattern.permute.xlu0 26
    %536 = vperm.xlu0 %535, %v499
    %v537 = vpop.permute.xlu0 %536
    %v539 = vmul.f32 %v537, %v243
    %v540 = vadd.f32 %v528, %v539
    %541 = vset.pattern.permute.xlu0 27
    %542 = vperm.xlu0 %541, %v499
    %v543 = vpop.permute.xlu0 %542
    %v545 = vmul.f32 %v543, %v247
    %v546 = vadd.f32 %v534, %v545
    %547 = vset.pattern.permute.xlu0 28
    %548 = vperm.xlu0 %547, %v499
    %v549 = vpop.permute.xlu0 %548
    %v551 = vmul.f32 %v549, %v251
    %v552 = vadd.f32 %v540, %v551
    %553 = vset.pattern.permute.xlu0 29
    %554 = vperm.xlu0 %553, %v499
    %v555 = vpop.permute.xlu0 %554
    %v557 = vmul.f32 %v555, %v255
    %v558 = vadd.f32 %v546, %v557
    %v559 = vadd.f32 %v552, %v558
    %v561 = vrot.slane %v559, 6
    %562 = vrot.lane.b32.xlu0 %v561, 10
    %v563 = vpop.permute.xlu0 %562
    %v565 = vadd.f32 %v125, %v563
    %v566 = vxor.u32 %v565, 2147483648
    %v567 = vmul.f32 %v566, 1.442695
    %v568 = vpow.pop %v567
    %v569 = vadd.f32 %v568, 1.0
    %v570 = vrcp.pop %v569
    %v571 = vmul.f32 1.0, %v570
    %v572 = vadd.f32 %v559, %v287
    %v574 = vrot.slane %v572, 6
    %575 = vrot.lane.b32.xlu0 %v574, 118
    %v576 = vpop.permute.xlu0 %575
    %v578 = vmul.f32 %v571, %v576
    %580 = vrot.lane.b32.xlu0 %v578, 20
    %v581 = vpop.permute.xlu0 %580
    %v583 = vadd.f32 %v125, %v581
    %v584 = vtanh.pop %v583
    %v585 = vsub.f32 1.0, %v571
    %587 = vrot.lane.b32.xlu0 %v584, 118
    %v588 = vpop.permute.xlu0 %587
    %v590 = vmul.f32 %v585, %v588
    %v591 = vrot.slane %v499, 6
    %v593 = vmul.f32 %v571, %v591
    %v594 = vadd.f32 %v590, %v593
    %596 = vset.pattern.permute.xlu0 20
    %597 = vperm.xlu0 %596, %v594
    %v598 = vpop.permute.xlu0 %597
    %v600 = vmul.f32 %v598, %v219
    %601 = vset.pattern.permute.xlu0 21
    %602 = vperm.xlu0 %601, %v594
    %v603 = vpop.permute.xlu0 %602
    %v605 = vmul.f32 %v603, %v223
    %606 = vset.pattern.permute.xlu0 22
    %607 = vperm.xlu0 %606, %v594
    %v608 = vpop.permute.xlu0 %607
    %v610 = vmul.f32 %v608, %v227
    %v611 = vadd.f32 %v600, %v610
    %612 = vset.pattern.permute.xlu0 23
    %613 = vperm.xlu0 %612, %v594
    %v614 = vpop.permute.xlu0 %613
    %v616 = vmul.f32 %v614, %v231
    %v617 = vadd.f32 %v605, %v616
    %618 = vset.pattern.permute.xlu0 24
    %619 = vperm.xlu0 %618, %v594
    %v620 = vpop.permute.xlu0 %619
    %v622 = vmul.f32 %v620, %v235
    %v623 = vadd.f32 %v611, %v622
    %624 = vset.pattern.permute.xlu0 25
    %625 = vperm.xlu0 %624, %v594
    %v626 = vpop.permute.xlu0 %625
    %v628 = vmul.f32 %v626, %v239
    %v629 = vadd.f32 %v617, %v628
    %630 = vset.pattern.permute.xlu0 26
    %631 = vperm.xlu0 %630, %v594
    %v632 = vpop.permute.xlu0 %631
    %v634 = vmul.f32 %v632, %v243
    %v635 = vadd.f32 %v623, %v634
    %636 = vset.pattern.permute.xlu0 27
    %637 = vperm.xlu0 %636, %v594
    %v638 = vpop.permute.xlu0 %637
    %v640 = vmul.f32 %v638, %v247
    %v641 = vadd.f32 %v629, %v640
    %642 = vset.pattern.permute.xlu0 28
    %643 = vperm.xlu0 %642, %v594
    %v644 = vpop.permute.xlu0 %643
    %v646 = vmul.f32 %v644, %v251
    %v647 = vadd.f32 %v635, %v646
    %648 = vset.pattern.permute.xlu0 29
    %649 = vperm.xlu0 %648, %v594
    %v650 = vpop.permute.xlu0 %649
    %v652 = vmul.f32 %v650, %v255
    %v653 = vadd.f32 %v641, %v652
    %v654 = vadd.f32 %v647, %v653
    %v656 = vrot.slane %v654, 6
    %657 = vrot.lane.b32.xlu0 %v656, 10
    %v658 = vpop.permute.xlu0 %657
    %v660 = vadd.f32 %v125, %v658
    %v661 = vxor.u32 %v660, 2147483648
    %v662 = vmul.f32 %v661, 1.442695
    %v663 = vpow.pop %v662
    %v664 = vadd.f32 %v663, 1.0
    %v665 = vrcp.pop %v664
    %v666 = vmul.f32 1.0, %v665
    %v667 = vadd.f32 %v654, %v287
    %v669 = vrot.slane %v667, 6
    %670 = vrot.lane.b32.xlu0 %v669, 118
    %v671 = vpop.permute.xlu0 %670
    %v673 = vmul.f32 %v666, %v671
    %675 = vrot.lane.b32.xlu0 %v673, 20
    %v676 = vpop.permute.xlu0 %675
    %v678 = vadd.f32 %v125, %v676
    %v679 = vtanh.pop %v678
    %v680 = vsub.f32 1.0, %v666
    %682 = vrot.lane.b32.xlu0 %v679, 118
    %v683 = vpop.permute.xlu0 %682
    %v685 = vmul.f32 %v680, %v683
    %v686 = vrot.slane %v594, 6
    %v688 = vmul.f32 %v666, %v686
    %v689 = vadd.f32 %v685, %v688
    %691 = vset.pattern.permute.xlu0 20
    %692 = vperm.xlu0 %691, %v689
    %v693 = vpop.permute.xlu0 %692
    %v695 = vmul.f32 %v693, %v219
    %696 = vset.pattern.permute.xlu0 21
    %697 = vperm.xlu0 %696, %v689
    %v698 = vpop.permute.xlu0 %697
    %v700 = vmul.f32 %v698, %v223
    %701 = vset.pattern.permute.xlu0 22
    %702 = vperm.xlu0 %701, %v689
    %v703 = vpop.permute.xlu0 %702
    %v705 = vmul.f32 %v703, %v227
    %v706 = vadd.f32 %v695, %v705
    %707 = vset.pattern.permute.xlu0 23
    %708 = vperm.xlu0 %707, %v689
    %v709 = vpop.permute.xlu0 %708
    %v711 = vmul.f32 %v709, %v231
    %v712 = vadd.f32 %v700, %v711
    %713 = vset.pattern.permute.xlu0 24
    %714 = vperm.xlu0 %713, %v689
    %v715 = vpop.permute.xlu0 %714
    %v717 = vmul.f32 %v715, %v235
    %v718 = vadd.f32 %v706, %v717
    %719 = vset.pattern.permute.xlu0 25
    %720 = vperm.xlu0 %719, %v689
    %v721 = vpop.permute.xlu0 %720
    %v723 = vmul.f32 %v721, %v239
    %v724 = vadd.f32 %v712, %v723
    %725 = vset.pattern.permute.xlu0 26
    %726 = vperm.xlu0 %725, %v689
    %v727 = vpop.permute.xlu0 %726
    %v729 = vmul.f32 %v727, %v243
    %v730 = vadd.f32 %v718, %v729
    %731 = vset.pattern.permute.xlu0 27
    %732 = vperm.xlu0 %731, %v689
    %v733 = vpop.permute.xlu0 %732
    %v735 = vmul.f32 %v733, %v247
    %v736 = vadd.f32 %v724, %v735
    %737 = vset.pattern.permute.xlu0 28
    %738 = vperm.xlu0 %737, %v689
    %v739 = vpop.permute.xlu0 %738
    %v741 = vmul.f32 %v739, %v251
    %v742 = vadd.f32 %v730, %v741
    %743 = vset.pattern.permute.xlu0 29
    %744 = vperm.xlu0 %743, %v689
    %v745 = vpop.permute.xlu0 %744
    %v747 = vmul.f32 %v745, %v255
    %v748 = vadd.f32 %v736, %v747
    %v749 = vadd.f32 %v742, %v748
    %v751 = vrot.slane %v749, 6
    %752 = vrot.lane.b32.xlu0 %v751, 10
    %v753 = vpop.permute.xlu0 %752
    %v755 = vadd.f32 %v125, %v753
    %v756 = vxor.u32 %v755, 2147483648
    %v757 = vmul.f32 %v756, 1.442695
    %v758 = vpow.pop %v757
    %v759 = vadd.f32 %v758, 1.0
    %v760 = vrcp.pop %v759
    %v761 = vmul.f32 1.0, %v760
    %v762 = vadd.f32 %v749, %v287
    %v764 = vrot.slane %v762, 6
    %765 = vrot.lane.b32.xlu0 %v764, 118
    %v766 = vpop.permute.xlu0 %765
    %v768 = vmul.f32 %v761, %v766
    %770 = vrot.lane.b32.xlu0 %v768, 20
    %v771 = vpop.permute.xlu0 %770
    %v773 = vadd.f32 %v125, %v771
    %v774 = vtanh.pop %v773
    %v775 = vsub.f32 1.0, %v761
    %777 = vrot.lane.b32.xlu0 %v774, 118
    %v778 = vpop.permute.xlu0 %777
    %v780 = vmul.f32 %v775, %v778
    %v781 = vrot.slane %v689, 6
    %v783 = vmul.f32 %v761, %v781
    %v784 = vadd.f32 %v780, %v783
    %786 = vset.pattern.permute.xlu0 20
    %787 = vperm.xlu0 %786, %v784
    %v788 = vpop.permute.xlu0 %787
    %v790 = vmul.f32 %v788, %v219
    %791 = vset.pattern.permute.xlu0 21
    %792 = vperm.xlu0 %791, %v784
    %v793 = vpop.permute.xlu0 %792
    %v795 = vmul.f32 %v793, %v223
    %796 = vset.pattern.permute.xlu0 22
    %797 = vperm.xlu0 %796, %v784
    %v798 = vpop.permute.xlu0 %797
    %v800 = vmul.f32 %v798, %v227
    %v801 = vadd.f32 %v790, %v800
    %802 = vset.pattern.permute.xlu0 23
    %803 = vperm.xlu0 %802, %v784
    %v804 = vpop.permute.xlu0 %803
    %v806 = vmul.f32 %v804, %v231
    %v807 = vadd.f32 %v795, %v806
    %808 = vset.pattern.permute.xlu0 24
    %809 = vperm.xlu0 %808, %v784
    %v810 = vpop.permute.xlu0 %809
    %v812 = vmul.f32 %v810, %v235
    %v813 = vadd.f32 %v801, %v812
    %814 = vset.pattern.permute.xlu0 25
    %815 = vperm.xlu0 %814, %v784
    %v816 = vpop.permute.xlu0 %815
    %v818 = vmul.f32 %v816, %v239
    %v819 = vadd.f32 %v807, %v818
    %820 = vset.pattern.permute.xlu0 26
    %821 = vperm.xlu0 %820, %v784
    %v822 = vpop.permute.xlu0 %821
    %v824 = vmul.f32 %v822, %v243
    %v825 = vadd.f32 %v813, %v824
    %826 = vset.pattern.permute.xlu0 27
    %827 = vperm.xlu0 %826, %v784
    %v828 = vpop.permute.xlu0 %827
    %v830 = vmul.f32 %v828, %v247
    %v831 = vadd.f32 %v819, %v830
    %832 = vset.pattern.permute.xlu0 28
    %833 = vperm.xlu0 %832, %v784
    %v834 = vpop.permute.xlu0 %833
    %v836 = vmul.f32 %v834, %v251
    %v837 = vadd.f32 %v825, %v836
    %838 = vset.pattern.permute.xlu0 29
    %839 = vperm.xlu0 %838, %v784
    %v840 = vpop.permute.xlu0 %839
    %v842 = vmul.f32 %v840, %v255
    %v843 = vadd.f32 %v831, %v842
    %v844 = vadd.f32 %v837, %v843
    %v846 = vrot.slane %v844, 6
    %847 = vrot.lane.b32.xlu0 %v846, 10
    %v848 = vpop.permute.xlu0 %847
    %v850 = vadd.f32 %v125, %v848
    %v851 = vxor.u32 %v850, 2147483648
    %v852 = vmul.f32 %v851, 1.442695
    %v853 = vpow.pop %v852
    %v854 = vadd.f32 %v853, 1.0
    %v855 = vrcp.pop %v854
    %v856 = vmul.f32 1.0, %v855
    %v857 = vadd.f32 %v844, %v287
    %v859 = vrot.slane %v857, 6
    %860 = vrot.lane.b32.xlu0 %v859, 118
    %v861 = vpop.permute.xlu0 %860
    %v863 = vmul.f32 %v856, %v861
    %865 = vrot.lane.b32.xlu0 %v863, 20
    %v866 = vpop.permute.xlu0 %865
    %v868 = vadd.f32 %v125, %v866
    %v869 = vtanh.pop %v868
    %v870 = vsub.f32 1.0, %v856
    %872 = vrot.lane.b32.xlu0 %v869, 118
    %v873 = vpop.permute.xlu0 %872
    %v875 = vmul.f32 %v870, %v873
    %v876 = vrot.slane %v784, 6
    %v878 = vmul.f32 %v856, %v876
    %v879 = vadd.f32 %v875, %v878
    %881 = vset.pattern.permute.xlu0 20
    %882 = vperm.xlu0 %881, %v879
    %v883 = vpop.permute.xlu0 %882
    %v885 = vmul.f32 %v883, %v219
    %886 = vset.pattern.permute.xlu0 21
    %887 = vperm.xlu0 %886, %v879
    %v888 = vpop.permute.xlu0 %887
    %v890 = vmul.f32 %v888, %v223
    %891 = vset.pattern.permute.xlu0 22
    %892 = vperm.xlu0 %891, %v879
    %v893 = vpop.permute.xlu0 %892
    %v895 = vmul.f32 %v893, %v227
    %v896 = vadd.f32 %v885, %v895
    %897 = vset.pattern.permute.xlu0 23
    %898 = vperm.xlu0 %897, %v879
    %v899 = vpop.permute.xlu0 %898
    %v901 = vmul.f32 %v899, %v231
    %v902 = vadd.f32 %v890, %v901
    %903 = vset.pattern.permute.xlu0 24
    %904 = vperm.xlu0 %903, %v879
    %v905 = vpop.permute.xlu0 %904
    %v907 = vmul.f32 %v905, %v235
    %v908 = vadd.f32 %v896, %v907
    %909 = vset.pattern.permute.xlu0 25
    %910 = vperm.xlu0 %909, %v879
    %v911 = vpop.permute.xlu0 %910
    %v913 = vmul.f32 %v911, %v239
    %v914 = vadd.f32 %v902, %v913
    %915 = vset.pattern.permute.xlu0 26
    %916 = vperm.xlu0 %915, %v879
    %v917 = vpop.permute.xlu0 %916
    %v919 = vmul.f32 %v917, %v243
    %v920 = vadd.f32 %v908, %v919
    %921 = vset.pattern.permute.xlu0 27
    %922 = vperm.xlu0 %921, %v879
    %v923 = vpop.permute.xlu0 %922
    %v925 = vmul.f32 %v923, %v247
    %v926 = vadd.f32 %v914, %v925
    %927 = vset.pattern.permute.xlu0 28
    %928 = vperm.xlu0 %927, %v879
    %v929 = vpop.permute.xlu0 %928
    %v931 = vmul.f32 %v929, %v251
    %v932 = vadd.f32 %v920, %v931
    %933 = vset.pattern.permute.xlu0 29
    %934 = vperm.xlu0 %933, %v879
    %v935 = vpop.permute.xlu0 %934
    %v937 = vmul.f32 %v935, %v255
    %v938 = vadd.f32 %v926, %v937
    %v939 = vadd.f32 %v932, %v938
    %v941 = vrot.slane %v939, 6
    %942 = vrot.lane.b32.xlu0 %v941, 10
    %v943 = vpop.permute.xlu0 %942
    %v945 = vadd.f32 %v126, %v943
    %v946 = vxor.u32 %v945, 2147483648
    %v947 = vmul.f32 %v946, 1.442695
    %v948 = vpow.pop %v947
    %v949 = vadd.f32 %v948, 1.0
    %v950 = vrcp.pop %v949
    %v951 = vmul.f32 1.0, %v950
    %v952 = vadd.f32 %v939, %v287
    %v954 = vrot.slane %v952, 6
    %955 = vrot.lane.b32.xlu0 %v954, 118
    %v956 = vpop.permute.xlu0 %955
    %v958 = vmul.f32 %v951, %v956
    %960 = vrot.lane.b32.xlu0 %v958, 20
    %v961 = vpop.permute.xlu0 %960
    %v963 = vadd.f32 %v126, %v961
    %v964 = vtanh.pop %v963
    %v965 = vsub.f32 1.0, %v951
    %967 = vrot.lane.b32.xlu0 %v964, 118
    %v968 = vpop.permute.xlu0 %967
    %v970 = vmul.f32 %v965, %v968
    %v971 = vrot.slane %v879, 6
    %v973 = vmul.f32 %v951, %v971
    %v974 = vadd.f32 %v970, %v973
    %976 = vset.pattern.permute.xlu0 20
    %977 = vperm.xlu0 %976, %v974
    %v978 = vpop.permute.xlu0 %977
    %v980 = vmul.f32 %v978, %v219
    %981 = vset.pattern.permute.xlu0 21
    %982 = vperm.xlu0 %981, %v974
    %v983 = vpop.permute.xlu0 %982
    %v985 = vmul.f32 %v983, %v223
    %986 = vset.pattern.permute.xlu0 22
    %987 = vperm.xlu0 %986, %v974
    %v988 = vpop.permute.xlu0 %987
    %v990 = vmul.f32 %v988, %v227
    %v991 = vadd.f32 %v980, %v990
    %992 = vset.pattern.permute.xlu0 23
    %993 = vperm.xlu0 %992, %v974
    %v994 = vpop.permute.xlu0 %993
    %v996 = vmul.f32 %v994, %v231
    %v997 = vadd.f32 %v985, %v996
    %998 = vset.pattern.permute.xlu0 24
    %999 = vperm.xlu0 %998, %v974
    %v1000 = vpop.permute.xlu0 %999
    %v1002 = vmul.f32 %v1000, %v235
    %v1003 = vadd.f32 %v991, %v1002
    %1004 = vset.pattern.permute.xlu0 25
    %1005 = vperm.xlu0 %1004, %v974
    %v1006 = vpop.permute.xlu0 %1005
    %v1008 = vmul.f32 %v1006, %v239
    %v1009 = vadd.f32 %v997, %v1008
    %1010 = vset.pattern.permute.xlu0 26
    %1011 = vperm.xlu0 %1010, %v974
    %v1012 = vpop.permute.xlu0 %1011
    %v1014 = vmul.f32 %v1012, %v243
    %v1015 = vadd.f32 %v1003, %v1014
    %1016 = vset.pattern.permute.xlu0 27
    %1017 = vperm.xlu0 %1016, %v974
    %v1018 = vpop.permute.xlu0 %1017
    %v1020 = vmul.f32 %v1018, %v247
    %v1021 = vadd.f32 %v1009, %v1020
    %1022 = vset.pattern.permute.xlu0 28
    %1023 = vperm.xlu0 %1022, %v974
    %v1024 = vpop.permute.xlu0 %1023
    %v1026 = vmul.f32 %v1024, %v251
    %v1027 = vadd.f32 %v1015, %v1026
    %1028 = vset.pattern.permute.xlu0 29
    %1029 = vperm.xlu0 %1028, %v974
    %v1030 = vpop.permute.xlu0 %1029
    %v1032 = vmul.f32 %v1030, %v255
    %v1033 = vadd.f32 %v1021, %v1032
    %1035 = vrot.lane.b32.xlu0 %v1027, 98
    %v1036 = vpop.permute.xlu0 %1035
    %v1038 = vadd.f32 %v213, %v1036
    %1040 = vrot.lane.b32.xlu0 %v1033, 98
    %v1041 = vpop.permute.xlu0 %1040
    %v1043 = vadd.f32 %v1038, %v1041
    %vm1044 = vcmask 58368
    %v1045 = vsel %vm1044, %v1043, -inf
    %1046 = vmax.xlane.f32.xlu0 %v1045
    %v1047 = vpop.xlane.xlu0 %1046
    %v1048 = vsub.f32 %v1043, %v1047
    %v1049 = vmul.f32 %v1048, 1.442695
    %v1050 = vpow.pop %v1049
    %v1051 = vsel %vm1044, %v1050, 0.0
    %1052 = vadd.xlane.f32.xlu0 %v1051
    %v1053 = vpop.xlane.xlu0 %1052
    %v1054 = vrcp.pop %v1053
    %v1055 = vmul.f32 %v1050, %v1054
    %1056 = vst.msk [vmem:[#allocation2] sm:$0x3] %vm1044, %v1055
    // Predicated region
    $region18: #{tpu_custom_call.1} parent=1 // pred_check
      _
    $region19: #{tpu_custom_call.1} parent=1 // pred_check_branch
      %1058 = sbr.rel (0) target = $region21
    $region20: #{tpu_custom_call.1} parent=1 // pred_region
      %s1060 = ssub.s32 32, 32
      %1061 = vsyncadd [#allocation3], %s1060
      %s1063 = sshll.u32 [#allocation2], 4
      %s1064 = int_to_ptr.vmem [resolvable:$true] %s1063
      %1066 = dma.vmem_to_hbm [thread:$0]  %s1064, 32, %s4, [#allocation3]
    $region21: #{tpu_custom_call.1} parent=1 // pred_fallthru
      _
    // Predicated region
    $region22: #{tpu_custom_call.1} parent=1 // pred_check
      _
    $region23: #{tpu_custom_call.1} parent=1 // pred_check_branch
      %1068 = sbr.rel (0) target = $region25
    $region24: #{tpu_custom_call.1} parent=1 // pred_region
      %1069 = dma.done [#allocation3], 32
    $region25: #{tpu_custom_call.1} parent=1 // pred_fallthru
      _
    %1070 = vsyncpa [#allocation3], 1

</llo_original>
